<compile_context>
chip_gen: v6e
topology: v6e:2x2x1
jax: 0.10.0
libtpu: 0.0.40
codegen_flags: <defaults>
</compile_context>

<pallas_src>
import functools
import math

import jax
import jax.numpy as jnp
import numpy as np
from jax import lax
from jax.experimental import pallas as pl
from jax.experimental.pallas import tpu as pltpu


_CPARAMS = pltpu.CompilerParams(dimension_semantics=("parallel",))


# ----------------------- Kernel 1: GroupNorm + qkv conv ---------------------

def _gn_qkv_kernel(x_ref, gmap_ref, gn_w_ref, gn_b_ref, qkv_w_ref, qkv_b_ref,
                   qkv_ref, xn_ref, *, inv_group_size):
    # x: (1, C, HW) f32
    # gmap: (C, C) f32 0/1 matrix, gmap[i, j] = 1 iff channels i, j share a group
    # gn_w / gn_b: (C, 1) f32
    # qkv_w: (3*heads*dh, C) bf16 (q rows pre-scaled by 1/sqrt(dim))
    # qkv_b: (3*heads*dh, 1) f32 (q rows pre-scaled by 1/sqrt(dim))
    x = x_ref[0]                                                   # (C, HW)
    gmap = gmap_ref[...]

    # Group statistics, broadcast back per-channel by the (C, C) matmul.
    gsum = jnp.dot(gmap, x, preferred_element_type=jnp.float32)    # (C, HW)
    mean = jnp.sum(gsum, axis=1, keepdims=True) * inv_group_size   # (C, 1)
    d = x - mean
    gsq = jnp.dot(gmap, d * d, preferred_element_type=jnp.float32)
    var = jnp.sum(gsq, axis=1, keepdims=True) * inv_group_size     # (C, 1)
    xn = d * lax.rsqrt(var + 1e-5) * gn_w_ref[...] + gn_b_ref[...]
    xn_ref[0] = xn                                                 # residual (f32)

    # 1x1 conv == (Cout, C) @ (C, HW) on the MXU (bf16 in, f32 accumulate).
    qkv = jnp.dot(qkv_w_ref[...], xn.astype(jnp.bfloat16),
                  preferred_element_type=jnp.float32) + qkv_b_ref[...]
    qkv_ref[0] = qkv.astype(jnp.bfloat16)


# ------------------ Kernel 2: attention + out conv + residual ---------------

def _attn_out_kernel(q_ref, k_ref, vt_ref, xn_ref, out_w_ref, out_b_ref,
                     o_ref, *, heads):
    # q / k: (1, heads, S, D) bf16  (q already scaled by 1/sqrt(dim))
    # vt:    (1, heads, D, S) bf16  (v_flat transposed)
    # xn:    (1, C, S) f32          (normalized activations for the residual)
    # out_w: (heads, C, D) bf16     (per-head slice of the 1x1 out-conv weight)
    # out_b: (C, 1) f32
    acc = xn_ref[0] + out_b_ref[...]                               # (C, S) f32
    for h in range(heads):                                         # static unroll
        q = q_ref[0, h]                                            # (S, D)
        k = k_ref[0, h]                                            # (S, D)
        vt = vt_ref[0, h]                                          # (D, S)

        # Transposed scores: sT[j, i] = score[i, j].  The reference softmax is
        # over the QUERY axis (torch dim=2), which here is the last (lane) axis.
        sT = lax.dot_general(k, q, (((1,), (1,)), ((), ())),
                             preferred_element_type=jnp.float32)   # (S_k, S_q)
        sT = sT - jnp.max(sT, axis=-1, keepdims=True)
        e = jnp.exp(sT)
        wT = e * pl.reciprocal(jnp.sum(e, axis=-1, keepdims=True), approx=True)

        # out_w_h @ atten_h^T == (out_w_h @ v_flat^T) @ softmax^T
        # -> fuses the reference permute + out conv, no in-kernel transposes.
        wv = jnp.dot(out_w_ref[h], vt,
                     preferred_element_type=jnp.float32)           # (C, S_k)
        acc = acc + jnp.dot(wv.astype(jnp.bfloat16), wT.astype(jnp.bfloat16),
                            preferred_element_type=jnp.float32)    # (C, S_q)
    o_ref[0] = acc


# ------------------------------ Full forward --------------------------------

def atten_block_forward(x, params, *, dim, dim_head, heads, groups):
    n, C, H, W = x.shape
    HW = H * W
    qkv_ch = 3 * heads * dim_head
    x_chw = x.reshape(n, C, HW)

    # Fold the 1/sqrt(dim) score scale into the q rows of the qkv conv.
    scale = 1.0 / math.sqrt(dim)
    row_scale = jnp.tile(
        jnp.concatenate([jnp.full((dim_head,), scale, jnp.float32),
                         jnp.ones((2 * dim_head,), jnp.float32)]),
        heads)[:, None]                                             # (qkv_ch, 1)
    qkv_w = (params["qkv_w"] * row_scale).astype(jnp.bfloat16)
    qkv_b = params["qkv_b"][:, None] * row_scale                    # f32

    gn_w = params["gn_w"][:, None]                                  # (C, 1)
    gn_b = params["gn_b"][:, None]
    gidx = jnp.arange(C) // (C // groups)
    gmap = (gidx[:, None] == gidx[None, :]).astype(jnp.float32)     # (C, C)

    qkv, xn = pl.pallas_call(
        functools.partial(_gn_qkv_kernel,
                          inv_group_size=1.0 / ((C // groups) * HW)),
        out_shape=(jax.ShapeDtypeStruct((n, qkv_ch, HW), jnp.bfloat16),
                   jax.ShapeDtypeStruct((n, C, HW), jnp.float32)),
        grid=(n,),
        in_specs=[
            pl.BlockSpec((1, C, HW), lambda i: (i, 0, 0)),
            pl.BlockSpec((C, C), lambda i: (0, 0)),
            pl.BlockSpec((C, 1), lambda i: (0, 0)),
            pl.BlockSpec((C, 1), lambda i: (0, 0)),
            pl.BlockSpec((qkv_ch, C), lambda i: (0, 0)),
            pl.BlockSpec((qkv_ch, 1), lambda i: (0, 0)),
        ],
        out_specs=(pl.BlockSpec((1, qkv_ch, HW), lambda i: (i, 0, 0)),
                   pl.BlockSpec((1, C, HW), lambda i: (i, 0, 0))),
        compiler_params=_CPARAMS,
    )(x_chw, gmap, gn_w, gn_b, qkv_w, qkv_b)

    # PyTorch `.view(n, heads, -1, dim_head)`: flat reinterpretation of each
    # head's (dim_head, HW) block as (HW, dim_head).  Done as XLA reshapes on
    # the tiny bf16 qkv tensor between the two fused kernels.
    qkv4 = qkv.reshape(n, heads, 3 * dim_head, HW)
    q = qkv4[:, :, :dim_head, :].reshape(n, heads, HW, dim_head)
    k = qkv4[:, :, dim_head:2 * dim_head, :].reshape(n, heads, HW, dim_head)
    v = qkv4[:, :, 2 * dim_head:, :].reshape(n, heads, HW, dim_head)
    vt = jnp.swapaxes(v, -1, -2)                                    # (n,h,D,HW)

    out_w = jnp.transpose(params["out_w"].reshape(C, heads, dim_head),
                          (1, 0, 2)).astype(jnp.bfloat16)           # (heads,C,D)
    out_b = params["out_b"][:, None]

    y = pl.pallas_call(
        functools.partial(_attn_out_kernel, heads=heads),
        out_shape=jax.ShapeDtypeStruct((n, C, HW), jnp.float32),
        grid=(n,),
        in_specs=[
            pl.BlockSpec((1, heads, HW, dim_head), lambda i: (i, 0, 0, 0)),
            pl.BlockSpec((1, heads, HW, dim_head), lambda i: (i, 0, 0, 0)),
            pl.BlockSpec((1, heads, dim_head, HW), lambda i: (i, 0, 0, 0)),
            pl.BlockSpec((1, C, HW), lambda i: (i, 0, 0)),
            pl.BlockSpec((heads, C, dim_head), lambda i: (0, 0, 0)),
            pl.BlockSpec((C, 1), lambda i: (0, 0)),
        ],
        out_specs=pl.BlockSpec((1, C, HW), lambda i: (i, 0, 0)),
        compiler_params=_CPARAMS,
    )(q, k, vt, xn, out_w, out_b)

    return y.reshape(n, C, H, W)


# ---------------------------- Pure-JAX reference ----------------------------

def ref_forward(x, params, *, dim, dim_head, heads, groups):
    n, C, H, W = x.shape
    HW = H * W
    # GroupNorm
    xg = x.reshape(n, groups, (C // groups) * HW)
    mean = xg.mean(-1, keepdims=True)
    var = xg.var(-1, keepdims=True)
    xn = (xg - mean) / jnp.sqrt(var + 1e-5)
    xn = xn.reshape(n, C, H, W) * params["gn_w"][None, :, None, None] \
        + params["gn_b"][None, :, None, None]
    # qkv 1x1 conv
    qkv = jnp.einsum("oc,nchw->nohw", params["qkv_w"], xn) \
        + params["qkv_b"][None, :, None, None]
    qkv = qkv.reshape(n, heads, 3 * dim_head, HW)
    q, k, v = jnp.split(qkv, 3, axis=2)
    q = q.reshape(n, heads, HW, dim_head)          # torch .view flat reshape
    k = k.reshape(n, heads, HW, dim_head)
    v = v.reshape(n, heads, HW, dim_head)
    score = jnp.einsum("nhid,nhjd->nhij", q, k) / math.sqrt(dim)
    weight = jax.nn.softmax(score, axis=2)         # softmax over QUERY axis
    atten = jnp.einsum("nhij,nhjd->nhid", weight, v)
    atten = jnp.transpose(atten, (0, 1, 3, 2)).reshape(n, heads * dim_head, H, W)
    out = jnp.einsum("oc,nchw->nohw", params["out_w"], atten) \
        + params["out_b"][None, :, None, None]
    return xn + out


# ---------------------------------- main ------------------------------------

if __name__ == "__main__":
    dim, dim_head, heads, groups = 16, 8, 4, 8
    n, H, W = 2, 8, 8

    key = jax.random.PRNGKey(0)
    kx, k0, k1, k2, k3, k4, k5 = jax.random.split(key, 7)

    params = {
        "gn_w": 1.0 + 0.1 * jax.random.normal(k0, (dim,), jnp.float32),
        "gn_b": 0.1 * jax.random.normal(k1, (dim,), jnp.float32),
        "qkv_w": jax.random.normal(k2, (dim_head * 3 * heads, dim), jnp.float32)
        / math.sqrt(dim),
        "qkv_b": 0.1 * jax.random.normal(k3, (dim_head * 3 * heads,), jnp.float32),
        "out_w": jax.random.normal(k4, (dim, dim_head * heads), jnp.float32)
        / math.sqrt(dim_head * heads),
        "out_b": 0.1 * jax.random.normal(k5, (dim,), jnp.float32),
    }

    x = jax.random.normal(kx, (n, dim, H, W), jnp.float32)

    fwd = jax.jit(functools.partial(
        atten_block_forward, dim=dim, dim_head=dim_head, heads=heads,
        groups=groups))
    y = jax.block_until_ready(fwd(x, params))

    y_ref = jax.block_until_ready(ref_forward(
        x, params, dim=dim, dim_head=dim_head, heads=heads, groups=groups))

    assert y.shape == (n, dim, H, W)
    # Tolerance accommodates the bf16 MXU inputs (f32 accumulation) vs the
    # pure-f32 reference.
    assert np.allclose(np.asarray(y), np.asarray(y_ref), atol=3e-2, rtol=3e-2), (
        "Pallas output mismatch vs reference"
    )

    print("KERNEL_OK")
</pallas_src>

<mosaic_0001>
module attributes {stable_mosaic.version = 11 : i64} {
  func.func @_gn_qkv_kernel(%arg0: i32, %arg1: memref<1x16x64xf32, #tpu.memory_space<vmem>>, %arg2: memref<16x16xf32, #tpu.memory_space<vmem>>, %arg3: memref<16x1xf32, #tpu.memory_space<vmem>>, %arg4: memref<16x1xf32, #tpu.memory_space<vmem>>, %arg5: memref<96x16xbf16, #tpu.memory_space<vmem>>, %arg6: memref<96x1xf32, #tpu.memory_space<vmem>>, %arg7: memref<1x96x64xbf16, #tpu.memory_space<vmem>>, %arg8: memref<1x16x64xf32, #tpu.memory_space<vmem>>) attributes {dimension_semantics = [#tpu.dimension_semantics<parallel>], iteration_bounds = array<i64: 2>, scalar_prefetch = 0 : i64, scratch_operands = 0 : i64, tpu.core_type = #tpu.core_type<tc>, window_params = [{transform_indices = @transform_0, window_bounds = array<i64: 1, 16, 64>}, {pipeline_mode = #tpu.pipeline_mode<synchronous>, transform_indices = @transform_1, window_bounds = array<i64: 16, 16>}, {pipeline_mode = #tpu.pipeline_mode<synchronous>, transform_indices = @transform_2, window_bounds = array<i64: 16, 1>}, {pipeline_mode = #tpu.pipeline_mode<synchronous>, transform_indices = @transform_3, window_bounds = array<i64: 16, 1>}, {pipeline_mode = #tpu.pipeline_mode<synchronous>, transform_indices = @transform_4, window_bounds = array<i64: 96, 16>}, {pipeline_mode = #tpu.pipeline_mode<synchronous>, transform_indices = @transform_5, window_bounds = array<i64: 96, 1>}, {transform_indices = @transform_6, window_bounds = array<i64: 1, 96, 64>}, {transform_indices = @transform_7, window_bounds = array<i64: 1, 16, 64>}]} {
    %c0 = arith.constant 0 : index
    %c0_0 = arith.constant 0 : index
    %c0_1 = arith.constant 0 : index
    %0 = vector.load %arg1[%c0, %c0_0, %c0_1] : memref<1x16x64xf32, #tpu.memory_space<vmem>>, vector<1x16x64xf32>
    %1 = vector.shape_cast %0 : vector<1x16x64xf32> to vector<16x64xf32>
    %c0_2 = arith.constant 0 : index
    %c0_3 = arith.constant 0 : index
    %2 = vector.load %arg2[%c0_2, %c0_3] : memref<16x16xf32, #tpu.memory_space<vmem>>, vector<16x16xf32>
    %cst = arith.constant dense<0.000000e+00> : vector<16x64xf32>
    %3 = tpu.matmul %2, %1, %cst {dimension_numbers = #tpu.dot_dimension_numbers<[1], [0], [0], [1], [0, 0, 1, 1], [], []>} : vector<16x16xf32>, vector<16x64xf32>, vector<16x64xf32> -> vector<16x64xf32>
    %cst_4 = arith.constant dense<0.000000e+00> : vector<16xf32>
    %4 = vector.multi_reduction <add>, %3, %cst_4 [1] : vector<16x64xf32> to vector<16xf32>
    %5 = vector.shape_cast %4 : vector<16xf32> to vector<16x1xf32>
    %cst_5 = arith.constant 7.812500e-03 : f32
    %6 = vector.broadcast %cst_5 : f32 to vector<16x1xf32>
    %7 = arith.mulf %5, %6 : vector<16x1xf32>
    %8 = vector.broadcast %7 : vector<16x1xf32> to vector<16x64xf32>
    %9 = arith.subf %1, %8 : vector<16x64xf32>
    %10 = arith.mulf %9, %9 : vector<16x64xf32>
    %cst_6 = arith.constant dense<0.000000e+00> : vector<16x64xf32>
    %11 = tpu.matmul %2, %10, %cst_6 {dimension_numbers = #tpu.dot_dimension_numbers<[1], [0], [0], [1], [0, 0, 1, 1], [], []>} : vector<16x16xf32>, vector<16x64xf32>, vector<16x64xf32> -> vector<16x64xf32>
    %cst_7 = arith.constant dense<0.000000e+00> : vector<16xf32>
    %12 = vector.multi_reduction <add>, %11, %cst_7 [1] : vector<16x64xf32> to vector<16xf32>
    %13 = vector.shape_cast %12 : vector<16xf32> to vector<16x1xf32>
    %cst_8 = arith.constant 7.812500e-03 : f32
    %14 = vector.broadcast %cst_8 : f32 to vector<16x1xf32>
    %15 = arith.mulf %13, %14 : vector<16x1xf32>
    %cst_9 = arith.constant 9.99999974E-6 : f32
    %16 = vector.broadcast %cst_9 : f32 to vector<16x1xf32>
    %17 = arith.addf %15, %16 : vector<16x1xf32>
    %18 = math.rsqrt %17 : vector<16x1xf32>
    %19 = vector.broadcast %18 : vector<16x1xf32> to vector<16x64xf32>
    %20 = arith.mulf %9, %19 : vector<16x64xf32>
    %c0_10 = arith.constant 0 : index
    %c0_11 = arith.constant 0 : index
    %21 = vector.load %arg3[%c0_10, %c0_11] : memref<16x1xf32, #tpu.memory_space<vmem>>, vector<16x1xf32>
    %22 = vector.broadcast %21 : vector<16x1xf32> to vector<16x64xf32>
    %23 = arith.mulf %20, %22 : vector<16x64xf32>
    %c0_12 = arith.constant 0 : index
    %c0_13 = arith.constant 0 : index
    %24 = vector.load %arg4[%c0_12, %c0_13] : memref<16x1xf32, #tpu.memory_space<vmem>>, vector<16x1xf32>
    %25 = vector.broadcast %24 : vector<16x1xf32> to vector<16x64xf32>
    %26 = arith.addf %23, %25 : vector<16x64xf32>
    %c0_14 = arith.constant 0 : index
    %c0_15 = arith.constant 0 : index
    %c0_16 = arith.constant 0 : index
    %27 = vector.load %arg8[%c0_14, %c0_15, %c0_16] : memref<1x16x64xf32, #tpu.memory_space<vmem>>, vector<1x16x64xf32>
    %28 = vector.shape_cast %27 : vector<1x16x64xf32> to vector<16x64xf32>
    %29 = vector.shape_cast %26 : vector<16x64xf32> to vector<1x16x64xf32>
    tpu.vector_store %arg8[%c0_14, %c0_15, %c0_16], %29 {strides = array<i32>} : memref<1x16x64xf32, #tpu.memory_space<vmem>>, vector<1x16x64xf32>,
    %c0_17 = arith.constant 0 : index
    %c0_18 = arith.constant 0 : index
    %30 = vector.load %arg5[%c0_17, %c0_18] : memref<96x16xbf16, #tpu.memory_space<vmem>>, vector<96x16xbf16>
    %31 = arith.truncf %26 : vector<16x64xf32> to vector<16x64xbf16>
    %cst_19 = arith.constant dense<0.000000e+00> : vector<96x64xf32>
    %32 = tpu.matmul %30, %31, %cst_19 {dimension_numbers = #tpu.dot_dimension_numbers<[1], [0], [0], [1], [0, 0, 1, 1], [], []>} : vector<96x16xbf16>, vector<16x64xbf16>, vector<96x64xf32> -> vector<96x64xf32>
    %c0_20 = arith.constant 0 : index
    %c0_21 = arith.constant 0 : index
    %33 = vector.load %arg6[%c0_20, %c0_21] : memref<96x1xf32, #tpu.memory_space<vmem>>, vector<96x1xf32>
    %34 = vector.broadcast %33 : vector<96x1xf32> to vector<96x64xf32>
    %35 = arith.addf %32, %34 : vector<96x64xf32>
    %36 = arith.truncf %35 : vector<96x64xf32> to vector<96x64xbf16>
    %c0_22 = arith.constant 0 : index
    %c0_23 = arith.constant 0 : index
    %c0_24 = arith.constant 0 : index
    %37 = vector.load %arg7[%c0_22, %c0_23, %c0_24] : memref<1x96x64xbf16, #tpu.memory_space<vmem>>, vector<1x96x64xbf16>
    %38 = vector.shape_cast %37 : vector<1x96x64xbf16> to vector<96x64xbf16>
    %39 = vector.shape_cast %36 : vector<96x64xbf16> to vector<1x96x64xbf16>
    tpu.vector_store %arg7[%c0_22, %c0_23, %c0_24], %39 {strides = array<i32>} : memref<1x96x64xbf16, #tpu.memory_space<vmem>>, vector<1x96x64xbf16>,
    return
  }
  func.func @transform_0(%arg0: i32) -> (i32, i32, i32) {
    %c0_i32 = arith.constant 0 : i32
    %c0_i32_0 = arith.constant 0 : i32
    %c0_i32_1 = arith.constant 0 : i32
    return %arg0, %c0_i32, %c0_i32_0 : i32, i32, i32
  }
  func.func @transform_1(%arg0: i32) -> (i32, i32) {
    %c0_i32 = arith.constant 0 : i32
    %c0_i32_0 = arith.constant 0 : i32
    %c0_i32_1 = arith.constant 0 : i32
    return %c0_i32, %c0_i32_0 : i32, i32
  }
  func.func @transform_2(%arg0: i32) -> (i32, i32) {
    %c0_i32 = arith.constant 0 : i32
    %c0_i32_0 = arith.constant 0 : i32
    %c0_i32_1 = arith.constant 0 : i32
    return %c0_i32, %c0_i32_0 : i32, i32
  }
  func.func @transform_3(%arg0: i32) -> (i32, i32) {
    %c0_i32 = arith.constant 0 : i32
    %c0_i32_0 = arith.constant 0 : i32
    %c0_i32_1 = arith.constant 0 : i32
    return %c0_i32, %c0_i32_0 : i32, i32
  }
  func.func @transform_4(%arg0: i32) -> (i32, i32) {
    %c0_i32 = arith.constant 0 : i32
    %c0_i32_0 = arith.constant 0 : i32
    %c0_i32_1 = arith.constant 0 : i32
    return %c0_i32, %c0_i32_0 : i32, i32
  }
  func.func @transform_5(%arg0: i32) -> (i32, i32) {
    %c0_i32 = arith.constant 0 : i32
    %c0_i32_0 = arith.constant 0 : i32
    %c0_i32_1 = arith.constant 0 : i32
    return %c0_i32, %c0_i32_0 : i32, i32
  }
  func.func @transform_6(%arg0: i32) -> (i32, i32, i32) {
    %c0_i32 = arith.constant 0 : i32
    %c0_i32_0 = arith.constant 0 : i32
    %c0_i32_1 = arith.constant 0 : i32
    return %arg0, %c0_i32, %c0_i32_0 : i32, i32, i32
  }
  func.func @transform_7(%arg0: i32) -> (i32, i32, i32) {
    %c0_i32 = arith.constant 0 : i32
    %c0_i32_0 = arith.constant 0 : i32
    %c0_i32_1 = arith.constant 0 : i32
    return %arg0, %c0_i32, %c0_i32_0 : i32, i32, i32
  }
}

module attributes {stable_mosaic.version = 11 : i64} {
  func.func @_attn_out_kernel(%arg0: i32, %arg1: memref<1x4x64x8xbf16, #tpu.memory_space<vmem>>, %arg2: memref<1x4x64x8xbf16, #tpu.memory_space<vmem>>, %arg3: memref<1x4x8x64xbf16, #tpu.memory_space<vmem>>, %arg4: memref<1x16x64xf32, #tpu.memory_space<vmem>>, %arg5: memref<4x16x8xbf16, #tpu.memory_space<vmem>>, %arg6: memref<16x1xf32, #tpu.memory_space<vmem>>, %arg7: memref<1x16x64xf32, #tpu.memory_space<vmem>>) attributes {dimension_semantics = [#tpu.dimension_semantics<parallel>], iteration_bounds = array<i64: 2>, scalar_prefetch = 0 : i64, scratch_operands = 0 : i64, tpu.core_type = #tpu.core_type<tc>, window_params = [{transform_indices = @transform_0, window_bounds = array<i64: 1, 4, 64, 8>}, {transform_indices = @transform_1, window_bounds = array<i64: 1, 4, 64, 8>}, {transform_indices = @transform_2, window_bounds = array<i64: 1, 4, 8, 64>}, {transform_indices = @transform_3, window_bounds = array<i64: 1, 16, 64>}, {pipeline_mode = #tpu.pipeline_mode<synchronous>, transform_indices = @transform_4, window_bounds = array<i64: 4, 16, 8>}, {pipeline_mode = #tpu.pipeline_mode<synchronous>, transform_indices = @transform_5, window_bounds = array<i64: 16, 1>}, {transform_indices = @transform_6, window_bounds = array<i64: 1, 16, 64>}]} {
    %c0 = arith.constant 0 : index
    %c0_0 = arith.constant 0 : index
    %c0_1 = arith.constant 0 : index
    %0 = vector.load %arg4[%c0, %c0_0, %c0_1] : memref<1x16x64xf32, #tpu.memory_space<vmem>>, vector<1x16x64xf32>
    %1 = vector.shape_cast %0 : vector<1x16x64xf32> to vector<16x64xf32>
    %c0_2 = arith.constant 0 : index
    %c0_3 = arith.constant 0 : index
    %2 = vector.load %arg6[%c0_2, %c0_3] : memref<16x1xf32, #tpu.memory_space<vmem>>, vector<16x1xf32>
    %3 = vector.broadcast %2 : vector<16x1xf32> to vector<16x64xf32>
    %4 = arith.addf %1, %3 : vector<16x64xf32>
    %c0_4 = arith.constant 0 : index
    %c0_5 = arith.constant 0 : index
    %c0_6 = arith.constant 0 : index
    %c0_7 = arith.constant 0 : index
    %5 = vector.load %arg1[%c0_4, %c0_5, %c0_6, %c0_7] : memref<1x4x64x8xbf16, #tpu.memory_space<vmem>>, vector<1x1x64x8xbf16>
    %6 = vector.shape_cast %5 : vector<1x1x64x8xbf16> to vector<64x8xbf16>
    %c0_8 = arith.constant 0 : index
    %c0_9 = arith.constant 0 : index
    %c0_10 = arith.constant 0 : index
    %c0_11 = arith.constant 0 : index
    %7 = vector.load %arg2[%c0_8, %c0_9, %c0_10, %c0_11] : memref<1x4x64x8xbf16, #tpu.memory_space<vmem>>, vector<1x1x64x8xbf16>
    %8 = vector.shape_cast %7 : vector<1x1x64x8xbf16> to vector<64x8xbf16>
    %c0_12 = arith.constant 0 : index
    %c0_13 = arith.constant 0 : index
    %c0_14 = arith.constant 0 : index
    %c0_15 = arith.constant 0 : index
    %9 = vector.load %arg3[%c0_12, %c0_13, %c0_14, %c0_15] : memref<1x4x8x64xbf16, #tpu.memory_space<vmem>>, vector<1x1x8x64xbf16>
    %10 = vector.shape_cast %9 : vector<1x1x8x64xbf16> to vector<8x64xbf16>
    %cst = arith.constant dense<0.000000e+00> : vector<64x64xf32>
    %11 = tpu.matmul %8, %6, %cst {dimension_numbers = #tpu.dot_dimension_numbers<[1], [1], [0], [0], [0, 0, 1, 0], [], []>} : vector<64x8xbf16>, vector<64x8xbf16>, vector<64x64xf32> -> vector<64x64xf32>
    %cst_16 = arith.constant dense<0xFF800000> : vector<64xf32>
    %12 = vector.multi_reduction <maximumf>, %11, %cst_16 [1] : vector<64x64xf32> to vector<64xf32>
    %13 = vector.shape_cast %12 : vector<64xf32> to vector<64x1xf32>
    %14 = vector.broadcast %13 : vector<64x1xf32> to vector<64x64xf32>
    %15 = arith.subf %11, %14 : vector<64x64xf32>
    %16 = math.exp %15 : vector<64x64xf32>
    %cst_17 = arith.constant dense<0.000000e+00> : vector<64xf32>
    %17 = vector.multi_reduction <add>, %16, %cst_17 [1] : vector<64x64xf32> to vector<64xf32>
    %18 = vector.shape_cast %17 : vector<64xf32> to vector<64x1xf32>
    %19 = tpu.reciprocal %18 {approx = true} : vector<64x1xf32> -> vector<64x1xf32>
    %20 = vector.broadcast %19 : vector<64x1xf32> to vector<64x64xf32>
    %21 = arith.mulf %16, %20 : vector<64x64xf32>
    %c0_18 = arith.constant 0 : index
    %c0_19 = arith.constant 0 : index
    %c0_20 = arith.constant 0 : index
    %22 = vector.load %arg5[%c0_18, %c0_19, %c0_20] : memref<4x16x8xbf16, #tpu.memory_space<vmem>>, vector<1x16x8xbf16>
    %23 = vector.shape_cast %22 : vector<1x16x8xbf16> to vector<16x8xbf16>
    %cst_21 = arith.constant dense<0.000000e+00> : vector<16x64xf32>
    %24 = tpu.matmul %23, %10, %cst_21 {dimension_numbers = #tpu.dot_dimension_numbers<[1], [0], [0], [1], [0, 0, 1, 1], [], []>} : vector<16x8xbf16>, vector<8x64xbf16>, vector<16x64xf32> -> vector<16x64xf32>
    %25 = arith.truncf %24 : vector<16x64xf32> to vector<16x64xbf16>
    %26 = arith.truncf %21 : vector<64x64xf32> to vector<64x64xbf16>
    %cst_22 = arith.constant dense<0.000000e+00> : vector<16x64xf32>
    %27 = tpu.matmul %25, %26, %cst_22 {dimension_numbers = #tpu.dot_dimension_numbers<[1], [0], [0], [1], [0, 0, 1, 1], [], []>} : vector<16x64xbf16>, vector<64x64xbf16>, vector<16x64xf32> -> vector<16x64xf32>
    %28 = arith.addf %4, %27 : vector<16x64xf32>
    %c0_23 = arith.constant 0 : index
    %c1 = arith.constant 1 : index
    %c0_24 = arith.constant 0 : index
    %c0_25 = arith.constant 0 : index
    %29 = vector.load %arg1[%c0_23, %c1, %c0_24, %c0_25] : memref<1x4x64x8xbf16, #tpu.memory_space<vmem>>, vector<1x1x64x8xbf16>
    %30 = vector.shape_cast %29 : vector<1x1x64x8xbf16> to vector<64x8xbf16>
    %c0_26 = arith.constant 0 : index
    %c1_27 = arith.constant 1 : index
    %c0_28 = arith.constant 0 : index
    %c0_29 = arith.constant 0 : index
    %31 = vector.load %arg2[%c0_26, %c1_27, %c0_28, %c0_29] : memref<1x4x64x8xbf16, #tpu.memory_space<vmem>>, vector<1x1x64x8xbf16>
    %32 = vector.shape_cast %31 : vector<1x1x64x8xbf16> to vector<64x8xbf16>
    %c0_30 = arith.constant 0 : index
    %c1_31 = arith.constant 1 : index
    %c0_32 = arith.constant 0 : index
    %c0_33 = arith.constant 0 : index
    %33 = vector.load %arg3[%c0_30, %c1_31, %c0_32, %c0_33] : memref<1x4x8x64xbf16, #tpu.memory_space<vmem>>, vector<1x1x8x64xbf16>
    %34 = vector.shape_cast %33 : vector<1x1x8x64xbf16> to vector<8x64xbf16>
    %cst_34 = arith.constant dense<0.000000e+00> : vector<64x64xf32>
    %35 = tpu.matmul %32, %30, %cst_34 {dimension_numbers = #tpu.dot_dimension_numbers<[1], [1], [0], [0], [0, 0, 1, 0], [], []>} : vector<64x8xbf16>, vector<64x8xbf16>, vector<64x64xf32> -> vector<64x64xf32>
    %cst_35 = arith.constant dense<0xFF800000> : vector<64xf32>
    %36 = vector.multi_reduction <maximumf>, %35, %cst_35 [1] : vector<64x64xf32> to vector<64xf32>
    %37 = vector.shape_cast %36 : vector<64xf32> to vector<64x1xf32>
    %38 = vector.broadcast %37 : vector<64x1xf32> to vector<64x64xf32>
    %39 = arith.subf %35, %38 : vector<64x64xf32>
    %40 = math.exp %39 : vector<64x64xf32>
    %cst_36 = arith.constant dense<0.000000e+00> : vector<64xf32>
    %41 = vector.multi_reduction <add>, %40, %cst_36 [1] : vector<64x64xf32> to vector<64xf32>
    %42 = vector.shape_cast %41 : vector<64xf32> to vector<64x1xf32>
    %43 = tpu.reciprocal %42 {approx = true} : vector<64x1xf32> -> vector<64x1xf32>
    %44 = vector.broadcast %43 : vector<64x1xf32> to vector<64x64xf32>
    %45 = arith.mulf %40, %44 : vector<64x64xf32>
    %c1_37 = arith.constant 1 : index
    %c0_38 = arith.constant 0 : index
    %c0_39 = arith.constant 0 : index
    %46 = vector.load %arg5[%c1_37, %c0_38, %c0_39] : memref<4x16x8xbf16, #tpu.memory_space<vmem>>, vector<1x16x8xbf16>
    %47 = vector.shape_cast %46 : vector<1x16x8xbf16> to vector<16x8xbf16>
    %cst_40 = arith.constant dense<0.000000e+00> : vector<16x64xf32>
    %48 = tpu.matmul %47, %34, %cst_40 {dimension_numbers = #tpu.dot_dimension_numbers<[1], [0], [0], [1], [0, 0, 1, 1], [], []>} : vector<16x8xbf16>, vector<8x64xbf16>, vector<16x64xf32> -> vector<16x64xf32>
    %49 = arith.truncf %48 : vector<16x64xf32> to vector<16x64xbf16>
    %50 = arith.truncf %45 : vector<64x64xf32> to vector<64x64xbf16>
    %cst_41 = arith.constant dense<0.000000e+00> : vector<16x64xf32>
    %51 = tpu.matmul %49, %50, %cst_41 {dimension_numbers = #tpu.dot_dimension_numbers<[1], [0], [0], [1], [0, 0, 1, 1], [], []>} : vector<16x64xbf16>, vector<64x64xbf16>, vector<16x64xf32> -> vector<16x64xf32>
    %52 = arith.addf %28, %51 : vector<16x64xf32>
    %c0_42 = arith.constant 0 : index
    %c2 = arith.constant 2 : index
    %c0_43 = arith.constant 0 : index
    %c0_44 = arith.constant 0 : index
    %53 = vector.load %arg1[%c0_42, %c2, %c0_43, %c0_44] : memref<1x4x64x8xbf16, #tpu.memory_space<vmem>>, vector<1x1x64x8xbf16>
    %54 = vector.shape_cast %53 : vector<1x1x64x8xbf16> to vector<64x8xbf16>
    %c0_45 = arith.constant 0 : index
    %c2_46 = arith.constant 2 : index
    %c0_47 = arith.constant 0 : index
    %c0_48 = arith.constant 0 : index
    %55 = vector.load %arg2[%c0_45, %c2_46, %c0_47, %c0_48] : memref<1x4x64x8xbf16, #tpu.memory_space<vmem>>, vector<1x1x64x8xbf16>
    %56 = vector.shape_cast %55 : vector<1x1x64x8xbf16> to vector<64x8xbf16>
    %c0_49 = arith.constant 0 : index
    %c2_50 = arith.constant 2 : index
    %c0_51 = arith.constant 0 : index
    %c0_52 = arith.constant 0 : index
    %57 = vector.load %arg3[%c0_49, %c2_50, %c0_51, %c0_52] : memref<1x4x8x64xbf16, #tpu.memory_space<vmem>>, vector<1x1x8x64xbf16>
    %58 = vector.shape_cast %57 : vector<1x1x8x64xbf16> to vector<8x64xbf16>
    %cst_53 = arith.constant dense<0.000000e+00> : vector<64x64xf32>
    %59 = tpu.matmul %56, %54, %cst_53 {dimension_numbers = #tpu.dot_dimension_numbers<[1], [1], [0], [0], [0, 0, 1, 0], [], []>} : vector<64x8xbf16>, vector<64x8xbf16>, vector<64x64xf32> -> vector<64x64xf32>
    %cst_54 = arith.constant dense<0xFF800000> : vector<64xf32>
    %60 = vector.multi_reduction <maximumf>, %59, %cst_54 [1] : vector<64x64xf32> to vector<64xf32>
    %61 = vector.shape_cast %60 : vector<64xf32> to vector<64x1xf32>
    %62 = vector.broadcast %61 : vector<64x1xf32> to vector<64x64xf32>
    %63 = arith.subf %59, %62 : vector<64x64xf32>
    %64 = math.exp %63 : vector<64x64xf32>
    %cst_55 = arith.constant dense<0.000000e+00> : vector<64xf32>
    %65 = vector.multi_reduction <add>, %64, %cst_55 [1] : vector<64x64xf32> to vector<64xf32>
    %66 = vector.shape_cast %65 : vector<64xf32> to vector<64x1xf32>
    %67 = tpu.reciprocal %66 {approx = true} : vector<64x1xf32> -> vector<64x1xf32>
    %68 = vector.broadcast %67 : vector<64x1xf32> to vector<64x64xf32>
    %69 = arith.mulf %64, %68 : vector<64x64xf32>
    %c2_56 = arith.constant 2 : index
    %c0_57 = arith.constant 0 : index
    %c0_58 = arith.constant 0 : index
    %70 = vector.load %arg5[%c2_56, %c0_57, %c0_58] : memref<4x16x8xbf16, #tpu.memory_space<vmem>>, vector<1x16x8xbf16>
    %71 = vector.shape_cast %70 : vector<1x16x8xbf16> to vector<16x8xbf16>
    %cst_59 = arith.constant dense<0.000000e+00> : vector<16x64xf32>
    %72 = tpu.matmul %71, %58, %cst_59 {dimension_numbers = #tpu.dot_dimension_numbers<[1], [0], [0], [1], [0, 0, 1, 1], [], []>} : vector<16x8xbf16>, vector<8x64xbf16>, vector<16x64xf32> -> vector<16x64xf32>
    %73 = arith.truncf %72 : vector<16x64xf32> to vector<16x64xbf16>
    %74 = arith.truncf %69 : vector<64x64xf32> to vector<64x64xbf16>
    %cst_60 = arith.constant dense<0.000000e+00> : vector<16x64xf32>
    %75 = tpu.matmul %73, %74, %cst_60 {dimension_numbers = #tpu.dot_dimension_numbers<[1], [0], [0], [1], [0, 0, 1, 1], [], []>} : vector<16x64xbf16>, vector<64x64xbf16>, vector<16x64xf32> -> vector<16x64xf32>
    %76 = arith.addf %52, %75 : vector<16x64xf32>
    %c0_61 = arith.constant 0 : index
    %c3 = arith.constant 3 : index
    %c0_62 = arith.constant 0 : index
    %c0_63 = arith.constant 0 : index
    %77 = vector.load %arg1[%c0_61, %c3, %c0_62, %c0_63] : memref<1x4x64x8xbf16, #tpu.memory_space<vmem>>, vector<1x1x64x8xbf16>
    %78 = vector.shape_cast %77 : vector<1x1x64x8xbf16> to vector<64x8xbf16>
    %c0_64 = arith.constant 0 : index
    %c3_65 = arith.constant 3 : index
    %c0_66 = arith.constant 0 : index
    %c0_67 = arith.constant 0 : index
    %79 = vector.load %arg2[%c0_64, %c3_65, %c0_66, %c0_67] : memref<1x4x64x8xbf16, #tpu.memory_space<vmem>>, vector<1x1x64x8xbf16>
    %80 = vector.shape_cast %79 : vector<1x1x64x8xbf16> to vector<64x8xbf16>
    %c0_68 = arith.constant 0 : index
    %c3_69 = arith.constant 3 : index
    %c0_70 = arith.constant 0 : index
    %c0_71 = arith.constant 0 : index
    %81 = vector.load %arg3[%c0_68, %c3_69, %c0_70, %c0_71] : memref<1x4x8x64xbf16, #tpu.memory_space<vmem>>, vector<1x1x8x64xbf16>
    %82 = vector.shape_cast %81 : vector<1x1x8x64xbf16> to vector<8x64xbf16>
    %cst_72 = arith.constant dense<0.000000e+00> : vector<64x64xf32>
    %83 = tpu.matmul %80, %78, %cst_72 {dimension_numbers = #tpu.dot_dimension_numbers<[1], [1], [0], [0], [0, 0, 1, 0], [], []>} : vector<64x8xbf16>, vector<64x8xbf16>, vector<64x64xf32> -> vector<64x64xf32>
    %cst_73 = arith.constant dense<0xFF800000> : vector<64xf32>
    %84 = vector.multi_reduction <maximumf>, %83, %cst_73 [1] : vector<64x64xf32> to vector<64xf32>
    %85 = vector.shape_cast %84 : vector<64xf32> to vector<64x1xf32>
    %86 = vector.broadcast %85 : vector<64x1xf32> to vector<64x64xf32>
    %87 = arith.subf %83, %86 : vector<64x64xf32>
    %88 = math.exp %87 : vector<64x64xf32>
    %cst_74 = arith.constant dense<0.000000e+00> : vector<64xf32>
    %89 = vector.multi_reduction <add>, %88, %cst_74 [1] : vector<64x64xf32> to vector<64xf32>
    %90 = vector.shape_cast %89 : vector<64xf32> to vector<64x1xf32>
    %91 = tpu.reciprocal %90 {approx = true} : vector<64x1xf32> -> vector<64x1xf32>
    %92 = vector.broadcast %91 : vector<64x1xf32> to vector<64x64xf32>
    %93 = arith.mulf %88, %92 : vector<64x64xf32>
    %c3_75 = arith.constant 3 : index
    %c0_76 = arith.constant 0 : index
    %c0_77 = arith.constant 0 : index
    %94 = vector.load %arg5[%c3_75, %c0_76, %c0_77] : memref<4x16x8xbf16, #tpu.memory_space<vmem>>, vector<1x16x8xbf16>
    %95 = vector.shape_cast %94 : vector<1x16x8xbf16> to vector<16x8xbf16>
    %cst_78 = arith.constant dense<0.000000e+00> : vector<16x64xf32>
    %96 = tpu.matmul %95, %82, %cst_78 {dimension_numbers = #tpu.dot_dimension_numbers<[1], [0], [0], [1], [0, 0, 1, 1], [], []>} : vector<16x8xbf16>, vector<8x64xbf16>, vector<16x64xf32> -> vector<16x64xf32>
    %97 = arith.truncf %96 : vector<16x64xf32> to vector<16x64xbf16>
    %98 = arith.truncf %93 : vector<64x64xf32> to vector<64x64xbf16>
    %cst_79 = arith.constant dense<0.000000e+00> : vector<16x64xf32>
    %99 = tpu.matmul %97, %98, %cst_79 {dimension_numbers = #tpu.dot_dimension_numbers<[1], [0], [0], [1], [0, 0, 1, 1], [], []>} : vector<16x64xbf16>, vector<64x64xbf16>, vector<16x64xf32> -> vector<16x64xf32>
    %100 = arith.addf %76, %99 : vector<16x64xf32>
    %c0_80 = arith.constant 0 : index
    %c0_81 = arith.constant 0 : index
    %c0_82 = arith.constant 0 : index
    %101 = vector.load %arg7[%c0_80, %c0_81, %c0_82] : memref<1x16x64xf32, #tpu.memory_space<vmem>>, vector<1x16x64xf32>
    %102 = vector.shape_cast %101 : vector<1x16x64xf32> to vector<16x64xf32>
    %103 = vector.shape_cast %100 : vector<16x64xf32> to vector<1x16x64xf32>
    tpu.vector_store %arg7[%c0_80, %c0_81, %c0_82], %103 {strides = array<i32>} : memref<1x16x64xf32, #tpu.memory_space<vmem>>, vector<1x16x64xf32>,
    return
  }
  func.func @transform_0(%arg0: i32) -> (i32, i32, i32, i32) {
    %c0_i32 = arith.constant 0 : i32
    %c0_i32_0 = arith.constant 0 : i32
    %c0_i32_1 = arith.constant 0 : i32
    %c0_i32_2 = arith.constant 0 : i32
    return %arg0, %c0_i32, %c0_i32_0, %c0_i32_1 : i32, i32, i32, i32
  }
  func.func @transform_1(%arg0: i32) -> (i32, i32, i32, i32) {
    %c0_i32 = arith.constant 0 : i32
    %c0_i32_0 = arith.constant 0 : i32
    %c0_i32_1 = arith.constant 0 : i32
    %c0_i32_2 = arith.constant 0 : i32
    return %arg0, %c0_i32, %c0_i32_0, %c0_i32_1 : i32, i32, i32, i32
  }
  func.func @transform_2(%arg0: i32) -> (i32, i32, i32, i32) {
    %c0_i32 = arith.constant 0 : i32
    %c0_i32_0 = arith.constant 0 : i32
    %c0_i32_1 = arith.constant 0 : i32
    %c0_i32_2 = arith.constant 0 : i32
    return %arg0, %c0_i32, %c0_i32_0, %c0_i32_1 : i32, i32, i32, i32
  }
  func.func @transform_3(%arg0: i32) -> (i32, i32, i32) {
    %c0_i32 = arith.constant 0 : i32
    %c0_i32_0 = arith.constant 0 : i32
    %c0_i32_1 = arith.constant 0 : i32
    return %arg0, %c0_i32, %c0_i32_0 : i32, i32, i32
  }
  func.func @transform_4(%arg0: i32) -> (i32, i32, i32) {
    %c0_i32 = arith.constant 0 : i32
    %c0_i32_0 = arith.constant 0 : i32
    %c0_i32_1 = arith.constant 0 : i32
    %c0_i32_2 = arith.constant 0 : i32
    return %c0_i32, %c0_i32_0, %c0_i32_1 : i32, i32, i32
  }
  func.func @transform_5(%arg0: i32) -> (i32, i32) {
    %c0_i32 = arith.constant 0 : i32
    %c0_i32_0 = arith.constant 0 : i32
    %c0_i32_1 = arith.constant 0 : i32
    return %c0_i32, %c0_i32_0 : i32, i32
  }
  func.func @transform_6(%arg0: i32) -> (i32, i32, i32) {
    %c0_i32 = arith.constant 0 : i32
    %c0_i32_0 = arith.constant 0 : i32
    %c0_i32_1 = arith.constant 0 : i32
    return %arg0, %c0_i32, %c0_i32_0 : i32, i32, i32
  }
}

</mosaic_0001>

<llo_original>
// kernel: tile.6
$region0: #{tile.6}
  #allocation0 [shape = 's32[1]{0}', space=sflag, size = 0x4, scoped, tag = 'scoped memory for tile.6']
  %s0 = inlined_call_operand.vmem [shape: f32[24], index: 0, kind: input, shape index: {}]
  %s1 = inlined_call_operand.vmem [shape: f32[4,24], index: 1, kind: output, shape index: {}]
  // Predicated region
  $region2: #{tile.6} parent=0 // pred_check
    _
  $region3: #{tile.6} parent=0 // pred_check_branch
    %3 = sbr.rel (0) target = $region5
  $region4: #{tile.6} parent=0 // pred_region
    _
  $region5: #{tile.6} parent=0 // pred_fallthru
    _
  %v4 = vld [vmem:[%s0] ss:$0 sm:$0xff]
  %5 = vst [vmem:[%s1] sm:$0xf] %v4

// kernel: mul.6
$region0: #{mul.6}
  %s0 = inlined_call_operand.vmem [shape: f32[4,24], index: 0, kind: input, shape index: {}]
  %s1 = inlined_call_operand.vmem [shape: f32[96], index: 1, kind: output, shape index: {}]
  $region1: #{mul.6} parent=0
    #allocation0 [shape = 'u8[4096]{0}', space=vmem, size = 0x1000, scoped, tag = 'scoped mem for output reshape']
    #allocation1 [shape = 'u8[4096]{0}', space=vmem, size = 0x1000, scoped, tag = 'scoped mem for input reshape']
    %s3 = sshll.u32 1, 4
    %s4 = ssub.s32 %s3, 1
    %v5 = vld [vmem:[%s0] sm:%s4]
    %6 = vst [vmem:[#allocation1] sm:%s4] %v5
    %v7 = vld [vmem:[#allocation1] sm:$0x1]
    %vm8 = vcmask 195584
    %9 = vst.msk [vmem:[#allocation0] sm:$0x1] %vm8, %v7
    %s10 = scalar_lea.vmem [#allocation1], 3
    %v11 = vld [vmem:[%s10] sm:$0x1]
    %12 = vrot.lane.b32.xlu0 %v11, 72
    %v13 = vpop.permute.xlu0 %12
    %vm14 = vcmask 785984
    %15 = vst.msk [vmem:[#allocation0] sm:$0x1] %vm14, %v13
    %s16 = scalar_lea.vmem [#allocation1], 2
    %v17 = vld [vmem:[%s16] sm:$0x1]
    %18 = vrot.lane.b32.xlu0 %v17, 48
    %v19 = vpop.permute.xlu0 %18
    %vm20 = vcmask 589184
    %21 = vst.msk [vmem:[#allocation0] sm:$0x1] %vm20, %v19
    %s22 = scalar_lea.vmem [#allocation1], 1
    %v23 = vld [vmem:[%s22] sm:$0x1]
    %24 = vrot.lane.b32.xlu0 %v23, 24
    %v25 = vpop.permute.xlu0 %24
    %vm26 = vcmask 392384
    %27 = vst.msk [vmem:[#allocation0] sm:$0x1] %vm26, %v25
    %s29 = sshll.u32 1, 1
    %s30 = ssub.s32 %s29, 1
    %v32 = vld [vmem:[#allocation0] sm:%s30]
    %s33 = sshll.u32 1, 1
    %s34 = ssub.s32 %s33, 1
    %35 = vst [vmem:[%s1] sm:%s34] %v32

// kernel: atten_block_forward.2
$region0: #{atten_block_forward.2}
  #allocation0 [shape = 'u32[]', space=smem, size = 0x4, offset = 0x4, fixed_abs, tag = 'smem constant byte address 0x4 - core index']
  #allocation1 [shape = 'u32[144,128]{1,0:T(1,128)}', space=vmem, size = 0x12000, scoped, tag = 'internal scratch']
  %s0 = inlined_call_operand.vmem [shape: f32[2,16,64], index: 0, kind: input, shape index: {}]
  %s1 = inlined_call_operand.vmem [shape: f32[16,16], index: 1, kind: input, shape index: {}]
  %s2 = inlined_call_operand.vmem [shape: f32[16,1], index: 2, kind: input, shape index: {}]
  %s3 = inlined_call_operand.vmem [shape: f32[16,1], index: 3, kind: input, shape index: {}]
  %s4 = inlined_call_operand.vmem [shape: bf16[96,16], index: 4, kind: input, shape index: {}]
  %s5 = inlined_call_operand.vmem [shape: f32[96,1], index: 5, kind: input, shape index: {}]
  %s6 = inlined_call_operand.vmem [shape: bf16[2,96,64], index: 6, kind: output, shape index: {0}]
  %s7 = inlined_call_operand.vmem [shape: f32[2,16,64], index: 7, kind: output, shape index: {1}]
  %8 = xla_tuple %s6, %s7
  %s9 = sld [smem:[#allocation0]]
  $region65: #{atten_block_forward.2} parent=0
    _
  %s11 = ssub.s32 1, %s9
  %s12 = scalar_select 0, %s11, %s9
  loop: start=0, step=1, limit=4
  $region2: #{atten_block_forward.2} parent=0 // loop_pre_header
    _
  $region3: #{atten_block_forward.2} parent=0 // loop_header
    %s14 = sphi 0, %s18
    %p15 = scmp.ge.s32.totalorder %s14, 4
    %s24 = sphi 0, %s26
    %s27 = sphi 0, %s24
    %s28 = sphi 0, %s27
    %s44 = sphi 0, %s28
    %s48 = sphi 0, %s48
    %s50 = sphi 0, %s48
    %s51 = sphi 0, %s50
    %s65 = sphi 0, %s51
    %s69 = sphi 0, %s69
    %s71 = sphi 0, %s69
    %s72 = sphi 0, %s71
    %s86 = sphi 0, %s72
    %s90 = sphi 0, %s90
    %s92 = sphi 0, %s90
    %s93 = sphi 0, %s92
    %s107 = sphi 0, %s93
    %s111 = sphi 0, %s111
    %s113 = sphi 0, %s111
    %s114 = sphi 0, %s113
    %s128 = sphi 0, %s114
    %s132 = sphi 0, %s132
    %s134 = sphi 0, %s132
    %s135 = sphi 0, %s134
    %s149 = sphi 0, %s135
    %s155 = sphi 0, %s157
    %s158 = sphi 0, %s155
    %s159 = sphi 0, %s158
    %s175 = sphi 0, %s159
    %s181 = sphi 0, %s183
    %s184 = sphi 0, %s181
    %s185 = sphi 0, %s184
    %s201 = sphi 0, %s185
  $region4: #{atten_block_forward.2} parent=0 // loop_header_branch
    %17 = sbr.rel (%p15) target = $region8
  $region5: #{atten_block_forward.2} parent=0 // loop_body
    %s19 = ssub.s32 %s14, 1
    %s20 = ssub.s32 %s14, 2
    %s21 = sadd.s32 %s14, 1
    %s22 = ssub.s32 %s14, %s21
    %p23 = scmp.eq.s32.totalorder %s22, 0
    %s25 = sadd.s32 %s24, 1
    %s26 = scalar_select %p23, %s24, %s25
    %p29 = pneg %p23
    %p30 = scmp.eq.s32.totalorder %s14, 1
    %p31 = por %p29, %p30
    %p32 = scmp.ne.s32.totalorder %s24, %s27
    %p33 = scmp.eq.s32.totalorder %s14, 0
    %p34 = por %p32, %p33
    %p35 = scmp.ne.s32.totalorder %s24, %s27
    %p36 = scmp.eq.s32.totalorder %s19, 1
    %p37 = por %p35, %p36
    %p38 = scmp.ne.s32.totalorder %s27, %s28
    %p39 = scmp.eq.s32.totalorder %s19, 0
    %p40 = por %p38, %p39
    %p41 = scmp.ne.s32.totalorder %s27, %s28
    %p42 = scmp.eq.s32.totalorder %s20, 1
    %p43 = por %p41, %p42
    %p45 = scmp.ne.s32.totalorder %s28, %s44
    %p46 = scmp.eq.s32.totalorder %s20, 0
    %p47 = por %p45, %p46
    %s49 = sadd.s32 %s48, 1
    %p52 = scmp.eq.s32.totalorder %s14, 1
    %p53 = scmp.ne.s32.totalorder %s48, %s50
    %p54 = scmp.eq.s32.totalorder %s14, 0
    %p55 = por %p53, %p54
    %p56 = scmp.ne.s32.totalorder %s48, %s50
    %p57 = scmp.eq.s32.totalorder %s19, 1
    %p58 = por %p56, %p57
    %p59 = scmp.ne.s32.totalorder %s50, %s51
    %p60 = scmp.eq.s32.totalorder %s19, 0
    %p61 = por %p59, %p60
    %p62 = scmp.ne.s32.totalorder %s50, %s51
    %p63 = scmp.eq.s32.totalorder %s20, 1
    %p64 = por %p62, %p63
    %p66 = scmp.ne.s32.totalorder %s51, %s65
    %p67 = scmp.eq.s32.totalorder %s20, 0
    %p68 = por %p66, %p67
    %s70 = sadd.s32 %s69, 1
    %p73 = scmp.eq.s32.totalorder %s14, 1
    %p74 = scmp.ne.s32.totalorder %s69, %s71
    %p75 = scmp.eq.s32.totalorder %s14, 0
    %p76 = por %p74, %p75
    %p77 = scmp.ne.s32.totalorder %s69, %s71
    %p78 = scmp.eq.s32.totalorder %s19, 1
    %p79 = por %p77, %p78
    %p80 = scmp.ne.s32.totalorder %s71, %s72
    %p81 = scmp.eq.s32.totalorder %s19, 0
    %p82 = por %p80, %p81
    %p83 = scmp.ne.s32.totalorder %s71, %s72
    %p84 = scmp.eq.s32.totalorder %s20, 1
    %p85 = por %p83, %p84
    %p87 = scmp.ne.s32.totalorder %s72, %s86
    %p88 = scmp.eq.s32.totalorder %s20, 0
    %p89 = por %p87, %p88
    %s91 = sadd.s32 %s90, 1
    %p94 = scmp.eq.s32.totalorder %s14, 1
    %p95 = scmp.ne.s32.totalorder %s90, %s92
    %p96 = scmp.eq.s32.totalorder %s14, 0
    %p97 = por %p95, %p96
    %p98 = scmp.ne.s32.totalorder %s90, %s92
    %p99 = scmp.eq.s32.totalorder %s19, 1
    %p100 = por %p98, %p99
    %p101 = scmp.ne.s32.totalorder %s92, %s93
    %p102 = scmp.eq.s32.totalorder %s19, 0
    %p103 = por %p101, %p102
    %p104 = scmp.ne.s32.totalorder %s92, %s93
    %p105 = scmp.eq.s32.totalorder %s20, 1
    %p106 = por %p104, %p105
    %p108 = scmp.ne.s32.totalorder %s93, %s107
    %p109 = scmp.eq.s32.totalorder %s20, 0
    %p110 = por %p108, %p109
    %s112 = sadd.s32 %s111, 1
    %p115 = scmp.eq.s32.totalorder %s14, 1
    %p116 = scmp.ne.s32.totalorder %s111, %s113
    %p117 = scmp.eq.s32.totalorder %s14, 0
    %p118 = por %p116, %p117
    %p119 = scmp.ne.s32.totalorder %s111, %s113
    %p120 = scmp.eq.s32.totalorder %s19, 1
    %p121 = por %p119, %p120
    %p122 = scmp.ne.s32.totalorder %s113, %s114
    %p123 = scmp.eq.s32.totalorder %s19, 0
    %p124 = por %p122, %p123
    %p125 = scmp.ne.s32.totalorder %s113, %s114
    %p126 = scmp.eq.s32.totalorder %s20, 1
    %p127 = por %p125, %p126
    %p129 = scmp.ne.s32.totalorder %s114, %s128
    %p130 = scmp.eq.s32.totalorder %s20, 0
    %p131 = por %p129, %p130
    %s133 = sadd.s32 %s132, 1
    %p136 = scmp.eq.s32.totalorder %s14, 1
    %p137 = scmp.ne.s32.totalorder %s132, %s134
    %p138 = scmp.eq.s32.totalorder %s14, 0
    %p139 = por %p137, %p138
    %p140 = scmp.ne.s32.totalorder %s132, %s134
    %p141 = scmp.eq.s32.totalorder %s19, 1
    %p142 = por %p140, %p141
    %p143 = scmp.ne.s32.totalorder %s134, %s135
    %p144 = scmp.eq.s32.totalorder %s19, 0
    %p145 = por %p143, %p144
    %p146 = scmp.ne.s32.totalorder %s134, %s135
    %p147 = scmp.eq.s32.totalorder %s20, 1
    %p148 = por %p146, %p147
    %p150 = scmp.ne.s32.totalorder %s135, %s149
    %p151 = scmp.eq.s32.totalorder %s20, 0
    %p152 = por %p150, %p151
    %s153 = ssub.s32 %s14, %s21
    %p154 = scmp.eq.s32.totalorder %s153, 0
    %s156 = sadd.s32 %s155, 1
    %s157 = scalar_select %p154, %s155, %s156
    %p160 = pneg %p154
    %p161 = scmp.eq.s32.totalorder %s14, 1
    %p162 = por %p160, %p161
    %p163 = scmp.ne.s32.totalorder %s155, %s158
    %p164 = scmp.eq.s32.totalorder %s14, 0
    %p165 = por %p163, %p164
    %p166 = scmp.ne.s32.totalorder %s155, %s158
    %p167 = scmp.eq.s32.totalorder %s19, 1
    %p168 = por %p166, %p167
    %p169 = scmp.ne.s32.totalorder %s158, %s159
    %p170 = scmp.eq.s32.totalorder %s19, 0
    %p171 = por %p169, %p170
    %p172 = scmp.ne.s32.totalorder %s158, %s159
    %p173 = scmp.eq.s32.totalorder %s20, 1
    %p174 = por %p172, %p173
    %p176 = scmp.ne.s32.totalorder %s159, %s175
    %p177 = scmp.eq.s32.totalorder %s20, 0
    %p178 = por %p176, %p177
    %s179 = ssub.s32 %s14, %s21
    %p180 = scmp.eq.s32.totalorder %s179, 0
    %s182 = sadd.s32 %s181, 1
    %s183 = scalar_select %p180, %s181, %s182
    %p186 = pneg %p180
    %p187 = scmp.eq.s32.totalorder %s14, 1
    %p188 = por %p186, %p187
    %p189 = scmp.ne.s32.totalorder %s181, %s184
    %p190 = scmp.eq.s32.totalorder %s14, 0
    %p191 = por %p189, %p190
    %p192 = scmp.ne.s32.totalorder %s181, %s184
    %p193 = scmp.eq.s32.totalorder %s19, 1
    %p194 = por %p192, %p193
    %p195 = scmp.ne.s32.totalorder %s184, %s185
    %p196 = scmp.eq.s32.totalorder %s19, 0
    %p197 = por %p195, %p196
    %p198 = scmp.ne.s32.totalorder %s184, %s185
    %p199 = scmp.eq.s32.totalorder %s20, 1
    %p200 = por %p198, %p199
    %p202 = scmp.ne.s32.totalorder %s185, %s201
    %p203 = scmp.eq.s32.totalorder %s20, 0
    %p204 = por %p202, %p203
    %p205 = scmp.le.s32.totalorder 1, %s14
    %p206 = scmp.lt.s32.totalorder %s14, 3
    %p207 = pnand %p205, %p206
    %p208 = pneg %p207
    // Predicated region
    $region9: #{atten_block_forward.2} parent=5 // pred_check
      _
    $region10: #{atten_block_forward.2} parent=5 // pred_check_branch
      %210 = sbr.rel (%p207) target = $region12
    $region11: #{atten_block_forward.2} parent=5 // pred_region
      %s211 = ssub.s32 %s14, 1
      // Predicated region
      $region13: #{atten_block_forward.2} parent=11 // pred_check
        %p212 = pneg %p61
      $region14: #{atten_block_forward.2} parent=11 // pred_check_branch
        %214 = sbr.rel (%p212) target = $region16
      $region15: #{atten_block_forward.2} parent=11 // pred_region
        _
      $region16: #{atten_block_forward.2} parent=11 // pred_fallthru
        _
      // Predicated region
      $region17: #{atten_block_forward.2} parent=11 // pred_check
        %p215 = pneg %p82
      $region18: #{atten_block_forward.2} parent=11 // pred_check_branch
        %217 = sbr.rel (%p215) target = $region20
      $region19: #{atten_block_forward.2} parent=11 // pred_region
        _
      $region20: #{atten_block_forward.2} parent=11 // pred_fallthru
        _
      // Predicated region
      $region21: #{atten_block_forward.2} parent=11 // pred_check
        %p218 = pneg %p103
      $region22: #{atten_block_forward.2} parent=11 // pred_check_branch
        %220 = sbr.rel (%p218) target = $region24
      $region23: #{atten_block_forward.2} parent=11 // pred_region
        _
      $region24: #{atten_block_forward.2} parent=11 // pred_fallthru
        _
      // Predicated region
      $region25: #{atten_block_forward.2} parent=11 // pred_check
        %p221 = pneg %p124
      $region26: #{atten_block_forward.2} parent=11 // pred_check_branch
        %223 = sbr.rel (%p221) target = $region28
      $region27: #{atten_block_forward.2} parent=11 // pred_region
        _
      $region28: #{atten_block_forward.2} parent=11 // pred_fallthru
        _
      // Predicated region
      $region29: #{atten_block_forward.2} parent=11 // pred_check
        %p224 = pneg %p145
      $region30: #{atten_block_forward.2} parent=11 // pred_check_branch
        %226 = sbr.rel (%p224) target = $region32
      $region31: #{atten_block_forward.2} parent=11 // pred_region
        _
      $region32: #{atten_block_forward.2} parent=11 // pred_fallthru
        _
    $region12: #{atten_block_forward.2} parent=5 // pred_fallthru
      _
    %p227 = scmp.lt.s32.totalorder %s14, 2
    // Predicated region
    $region33: #{atten_block_forward.2} parent=5 // pred_check
      %p228 = pneg %p227
    $region34: #{atten_block_forward.2} parent=5 // pred_check_branch
      %230 = sbr.rel (%p228) target = $region36
    $region35: #{atten_block_forward.2} parent=5 // pred_region
      // Predicated region
      $region37: #{atten_block_forward.2} parent=35 // pred_check
        %p231 = pneg %p34
      $region38: #{atten_block_forward.2} parent=35 // pred_check_branch
        %233 = sbr.rel (%p231) target = $region40
      $region39: #{atten_block_forward.2} parent=35 // pred_region
        %p234 = scmp.lt.s32.totalorder %s14, 1
        %s235 = scalar_select %p234, %s14, 1
        %s236 = smul.addr %s235, 2
        %s237 = smul.addr %s236, 8
        %s238 = scalar_lea.vmem %s0, %s237
      $region40: #{atten_block_forward.2} parent=35 // pred_fallthru
        _
    $region36: #{atten_block_forward.2} parent=5 // pred_fallthru
      _
    %p239 = scmp.le.s32.totalorder 1, %s14
    %p240 = scmp.lt.s32.totalorder %s14, 3
    %p241 = pnand %p239, %p240
    %p242 = pneg %p241
    // Predicated region
    $region41: #{atten_block_forward.2} parent=5 // pred_check
      _
    $region42: #{atten_block_forward.2} parent=5 // pred_check_branch
      %244 = sbr.rel (%p241) target = $region44
    $region43: #{atten_block_forward.2} parent=5 // pred_region
      %s245 = ssub.s32 %s14, 1
      %p246 = scmp.lt.s32.totalorder %s19, 1
      %s247 = scalar_select %p246, %s19, 1
      %s248 = smul.addr %s247, 2
      %s249 = smul.addr %s248, 8
      %s250 = scalar_lea.vmem %s0, %s249
      %p251 = pneg %p40
      %p252 = pneg %p37
      %p253 = pneg %p61
      %p254 = pneg %p58
      %p255 = pneg %p82
      %p256 = pneg %p79
      %p257 = pneg %p103
      %p258 = pneg %p100
      %p259 = pneg %p124
      %p260 = pneg %p121
      %p261 = pneg %p145
      %p262 = pneg %p142
      %p263 = pneg %p171
      %p264 = pneg %p168
      %p265 = scmp.lt.s32.totalorder %s19, 1
      %s266 = scalar_select %p265, %s19, 1
      %s267 = smul.addr %s266, 12
      %s268 = smul.addr %s267, 4
      %s269 = scalar_lea.vmem %s6, %s268
      %p270 = pneg %p197
      %p271 = pneg %p194
      %p272 = scmp.lt.s32.totalorder %s19, 1
      %s273 = scalar_select %p272, %s19, 1
      %s274 = smul.addr %s273, 2
      %s275 = smul.addr %s274, 8
      %s276 = scalar_lea.vmem %s7, %s275
      %p277 = scmp.lt.s32.totalorder %s19, 1
      %s278 = scalar_select %p277, %s19, 1
      %s279 = smul.addr %s278, 2
      %s280 = smul.addr %s279, 8
      %s281 = scalar_lea.vmem %s0, %s280
      %p282 = scmp.lt.s32.totalorder %s19, 1
      %s283 = scalar_select %p282, %s19, 1
      %s284 = smul.addr %s283, 12
      %s285 = smul.addr %s284, 4
      %s286 = scalar_lea.vmem %s6, %s285
      %p287 = scmp.lt.s32.totalorder %s19, 1
      %s288 = scalar_select %p287, %s19, 1
      %s289 = smul.addr %s288, 2
      %s290 = smul.addr %s289, 8
      %s291 = scalar_lea.vmem %s7, %s290
      %v293 = vld [vmem:[%s281] sm:$0xff]
      %v294 = vld [vmem:[%s281 + $0x8] sm:$0xff]
      %v295 = vld [vmem:[%s1] sm:$0xff]
      %v296 = vld [vmem:[%s1 + $0x8] sm:$0xff]
      %vm297 = vcmask 130048
      %v299 = vsel %vm297, %v295, 0
      %v302 = vsel %vm297, %v296, 0
      %304 = vmatprep.subr.mxu0 0.0
      %305 = vmatpush1.msra.mxu0 0.0
      %306 = vmatprep.subr.mxu0 0.0
      %307 = vmatpush1.msra.mxu0 0.0
      %308 = vmatprep.subr.mxu0 0.0
      %309 = vmatpush1.msra.mxu0 0.0
      %310 = vmatprep.subr.mxu0 0.0
      %311 = vmatpush1.msra.mxu0 0.0
      %312 = vmatprep.subr.mxu0 0.0
      %313 = vmatpush1.msra.mxu0 0.0
      %314 = vmatprep.subr.mxu0 0.0
      %315 = vmatpush1.msra.mxu0 0.0
      %316 = vmatprep.subr.mxu0 0.0
      %317 = vmatpush1.msra.mxu0 0.0
      %318 = vmatprep.subr.mxu0 0.0
      %319 = vmatpush1.msra.mxu0 0.0
      %320 = vmatprep.subr.mxu0 0.0
      %321 = vmatpush1.msra.mxu0 0.0
      %322 = vmatprep.subr.mxu0 0.0
      %323 = vmatpush1.msra.mxu0 0.0
      %324 = vmatprep.subr.mxu0 0.0
      %325 = vmatpush1.msra.mxu0 0.0
      %326 = vmatprep.subr.mxu0 0.0
      %327 = vmatpush1.msra.mxu0 0.0
      %328 = vmatprep.subr.mxu0 0.0
      %329 = vmatpush1.msra.mxu0 0.0
      %330 = vmatprep.subr.mxu0 0.0
      %331 = vmatpush1.msra.mxu0 0.0
      %332 = vmatprep.subr.mxu0 0.0
      %333 = vmatpush1.msra.mxu0 %v294
      %334 = vmatprep.subr.mxu0 0.0
      %335 = vmatpush1.msra.mxu0 %v293
      %336 = vmatprep.subr.mxu0 0.0
      %337 = vmatpush2.msra.mxu0 0.0
      %338 = vmatprep.subr.mxu0 0.0
      %339 = vmatpush2.msra.mxu0 0.0
      %340 = vmatprep.subr.mxu0 0.0
      %341 = vmatpush2.msra.mxu0 0.0
      %342 = vmatprep.subr.mxu0 0.0
      %343 = vmatpush2.msra.mxu0 0.0
      %344 = vmatprep.subr.mxu0 0.0
      %345 = vmatpush2.msra.mxu0 0.0
      %346 = vmatprep.subr.mxu0 0.0
      %347 = vmatpush2.msra.mxu0 0.0
      %348 = vmatprep.subr.mxu0 0.0
      %349 = vmatpush2.msra.mxu0 0.0
      %350 = vmatprep.subr.mxu0 0.0
      %351 = vmatpush2.msra.mxu0 0.0
      %352 = vmatprep.subr.mxu0 0.0
      %353 = vmatpush2.msra.mxu0 0.0
      %354 = vmatprep.subr.mxu0 0.0
      %355 = vmatpush2.msra.mxu0 0.0
      %356 = vmatprep.subr.mxu0 0.0
      %357 = vmatpush2.msra.mxu0 0.0
      %358 = vmatprep.subr.mxu0 0.0
      %359 = vmatpush2.msra.mxu0 0.0
      %360 = vmatprep.subr.mxu0 0.0
      %361 = vmatpush2.msra.mxu0 0.0
      %362 = vmatprep.subr.mxu0 0.0
      %363 = vmatpush2.msra.mxu0 0.0
      %364 = vmatprep.subr.mxu0 0.0
      %365 = vmatpush2.msra.mxu0 0.0
      %366 = vmatprep.subr.mxu0 0.0
      %367 = vmatpush2.msra.mxu0 0.0
      %368 = vmatprep.mubr.f32.mxu0 0.0
      %369 = vmatmul.mubr.f32.gmra.mxu0 %v299
      %v370 = vpop.f32.mrf.mxu0
      %v371 = vadd.f32 0.0, %v370
      %v372 = vpop.f32.mrf.mxu0
      %373 = vmatprep.mubr.f32.mxu0 0.0
      %374 = vmatmul.mubr.f32.gmra.mxu0 %v302
      %v375 = vpop.f32.mrf.mxu0
      %v376 = vadd.f32 0.0, %v375
      %v377 = vpop.f32.mrf.mxu0
      %378 = vdwg.mxu0
      %vm379 = vcmask 523264
      %v380 = vsel %vm379, %v371, 0.0
      %381 = vadd.xlane.f32.xlu0 %v380
      %v382 = vpop.xlane.xlu0 %381
      %v383 = vsel %vm379, %v376, 0.0
      %384 = vadd.xlane.f32.xlu0 %v383
      %v385 = vpop.xlane.xlu0 %384
      %v386 = vmul.f32 %v382, 0.0078125
      %v387 = vmul.f32 %v385, 0.0078125
      %v388 = vsub.f32 %v293, %v386
      %v389 = vsub.f32 %v294, %v387
      %v390 = vmul.f32 %v388, %v388
      %v391 = vmul.f32 %v389, %v389
      %392 = vmatprep.subr.mxu0 0.0
      %393 = vmatpush1.msra.mxu0 0.0
      %394 = vmatprep.subr.mxu0 0.0
      %395 = vmatpush1.msra.mxu0 0.0
      %396 = vmatprep.subr.mxu0 0.0
      %397 = vmatpush1.msra.mxu0 0.0
      %398 = vmatprep.subr.mxu0 0.0
      %399 = vmatpush1.msra.mxu0 0.0
      %400 = vmatprep.subr.mxu0 0.0
      %401 = vmatpush1.msra.mxu0 0.0
      %402 = vmatprep.subr.mxu0 0.0
      %403 = vmatpush1.msra.mxu0 0.0
      %404 = vmatprep.subr.mxu0 0.0
      %405 = vmatpush1.msra.mxu0 0.0
      %406 = vmatprep.subr.mxu0 0.0
      %407 = vmatpush1.msra.mxu0 0.0
      %408 = vmatprep.subr.mxu0 0.0
      %409 = vmatpush1.msra.mxu0 0.0
      %410 = vmatprep.subr.mxu0 0.0
      %411 = vmatpush1.msra.mxu0 0.0
      %412 = vmatprep.subr.mxu0 0.0
      %413 = vmatpush1.msra.mxu0 0.0
      %414 = vmatprep.subr.mxu0 0.0
      %415 = vmatpush1.msra.mxu0 0.0
      %416 = vmatprep.subr.mxu0 0.0
      %417 = vmatpush1.msra.mxu0 0.0
      %418 = vmatprep.subr.mxu0 0.0
      %419 = vmatpush1.msra.mxu0 0.0
      %420 = vmatprep.subr.mxu0 0.0
      %421 = vmatpush1.msra.mxu0 %v391
      %422 = vmatprep.subr.mxu0 0.0
      %423 = vmatpush1.msra.mxu0 %v390
      %424 = vmatprep.subr.mxu0 0.0
      %425 = vmatpush2.msra.mxu0 0.0
      %426 = vmatprep.subr.mxu0 0.0
      %427 = vmatpush2.msra.mxu0 0.0
      %428 = vmatprep.subr.mxu0 0.0
      %429 = vmatpush2.msra.mxu0 0.0
      %430 = vmatprep.subr.mxu0 0.0
      %431 = vmatpush2.msra.mxu0 0.0
      %432 = vmatprep.subr.mxu0 0.0
      %433 = vmatpush2.msra.mxu0 0.0
      %434 = vmatprep.subr.mxu0 0.0
      %435 = vmatpush2.msra.mxu0 0.0
      %436 = vmatprep.subr.mxu0 0.0
      %437 = vmatpush2.msra.mxu0 0.0
      %438 = vmatprep.subr.mxu0 0.0
      %439 = vmatpush2.msra.mxu0 0.0
      %440 = vmatprep.subr.mxu0 0.0
      %441 = vmatpush2.msra.mxu0 0.0
      %442 = vmatprep.subr.mxu0 0.0
      %443 = vmatpush2.msra.mxu0 0.0
      %444 = vmatprep.subr.mxu0 0.0
      %445 = vmatpush2.msra.mxu0 0.0
      %446 = vmatprep.subr.mxu0 0.0
      %447 = vmatpush2.msra.mxu0 0.0
      %448 = vmatprep.subr.mxu0 0.0
      %449 = vmatpush2.msra.mxu0 0.0
      %450 = vmatprep.subr.mxu0 0.0
      %451 = vmatpush2.msra.mxu0 0.0
      %452 = vmatprep.subr.mxu0 0.0
      %453 = vmatpush2.msra.mxu0 0.0
      %454 = vmatprep.subr.mxu0 0.0
      %455 = vmatpush2.msra.mxu0 0.0
      %456 = vmatprep.mubr.f32.mxu0 0.0
      %457 = vmatmul.mubr.f32.gmra.mxu0 %v299
      %v458 = vpop.f32.mrf.mxu0
      %v459 = vadd.f32 0.0, %v458
      %v460 = vpop.f32.mrf.mxu0
      %461 = vmatprep.mubr.f32.mxu0 0.0
      %462 = vmatmul.mubr.f32.gmra.mxu0 %v302
      %v463 = vpop.f32.mrf.mxu0
      %v464 = vadd.f32 0.0, %v463
      %v465 = vpop.f32.mrf.mxu0
      %466 = vdwg.mxu0
      %v467 = vsel %vm379, %v459, 0.0
      %468 = vadd.xlane.f32.xlu0 %v467
      %v469 = vpop.xlane.xlu0 %468
      %v470 = vsel %vm379, %v464, 0.0
      %471 = vadd.xlane.f32.xlu0 %v470
      %v472 = vpop.xlane.xlu0 %471
      %v473 = vmul.f32 %v469, 0.0078125
      %v474 = vmul.f32 %v472, 0.0078125
      %v475 = vadd.f32 %v473, 1e-05
      %v476 = vadd.f32 %v474, 1e-05
      %v477 = vrsqrt.pop %v475
      %v478 = vrsqrt.pop %v476
      %v479 = vmul.f32 %v388, %v477
      %v480 = vmul.f32 %v389, %v478
      %v481 = vld [vmem:[%s2] sm:$0xff]
      %v482 = vld [vmem:[%s2 + $0x8] sm:$0xff]
      %484 = vset.pattern.permute.xlu0 0
      %485 = vperm.xlu0 %484, %v481
      %v486 = vpop.permute.xlu0 %485
      %489 = vset.pattern.permute.xlu0 0
      %490 = vperm.xlu0 %489, %v482
      %v491 = vpop.permute.xlu0 %490
      %v493 = vmul.f32 %v479, %v486
      %v494 = vmul.f32 %v480, %v491
      %v495 = vld [vmem:[%s3] sm:$0xff]
      %v496 = vld [vmem:[%s3 + $0x8] sm:$0xff]
      %498 = vset.pattern.permute.xlu0 0
      %499 = vperm.xlu0 %498, %v495
      %v500 = vpop.permute.xlu0 %499
      %503 = vset.pattern.permute.xlu0 0
      %504 = vperm.xlu0 %503, %v496
      %v505 = vpop.permute.xlu0 %504
      %v507 = vadd.f32 %v493, %v500
      %v508 = vadd.f32 %v494, %v505
      %509 = vst.msk [vmem:[%s291] sm:$0xff] %vm379, %v507
      %510 = vst.msk [vmem:[%s291 + $0x8] sm:$0xff] %vm379, %v508
      %v511 = vld [vmem:[%s4] sm:$0xf]
      %v512 = vld [vmem:[%s4 + $0x4] sm:$0xf]
      %v513 = vld [vmem:[%s4 + $0x8] sm:$0xf]
      %v514 = vld [vmem:[%s4 + $0xc] sm:$0xf]
      %v515 = vld [vmem:[%s4 + $0x10] sm:$0xf]
      %v516 = vld [vmem:[%s4 + $0x14] sm:$0xf]
      %v517 = vld [vmem:[%s4 + $0x18] sm:$0xf]
      %v518 = vld [vmem:[%s4 + $0x1c] sm:$0xf]
      %v519 = vld [vmem:[%s4 + $0x20] sm:$0xf]
      %v520 = vld [vmem:[%s4 + $0x24] sm:$0xf]
      %v521 = vld [vmem:[%s4 + $0x28] sm:$0xf]
      %v522 = vld [vmem:[%s4 + $0x2c] sm:$0xf]
      %v523 = vpack.c.bf16 %v508, %v507
      %v524 = vld [vmem:[%s5] sm:$0xff]
      %v525 = vld [vmem:[%s5 + $0x8] sm:$0xff]
      %v526 = vld [vmem:[%s5 + $0x10] sm:$0xff]
      %v527 = vld [vmem:[%s5 + $0x18] sm:$0xff]
      %v528 = vld [vmem:[%s5 + $0x20] sm:$0xff]
      %v529 = vld [vmem:[%s5 + $0x28] sm:$0xff]
      %v530 = vld [vmem:[%s5 + $0x30] sm:$0xff]
      %v531 = vld [vmem:[%s5 + $0x38] sm:$0xff]
      %v532 = vld [vmem:[%s5 + $0x40] sm:$0xff]
      %v533 = vld [vmem:[%s5 + $0x48] sm:$0xff]
      %v534 = vld [vmem:[%s5 + $0x50] sm:$0xff]
      %v535 = vld [vmem:[%s5 + $0x58] sm:$0xff]
      %537 = vset.pattern.permute.xlu0 0
      %538 = vperm.xlu0 %537, %v524
      %v539 = vpop.permute.xlu0 %538
      %542 = vset.pattern.permute.xlu0 0
      %543 = vperm.xlu0 %542, %v525
      %v544 = vpop.permute.xlu0 %543
      %547 = vset.pattern.permute.xlu0 0
      %548 = vperm.xlu0 %547, %v526
      %v549 = vpop.permute.xlu0 %548
      %552 = vset.pattern.permute.xlu0 0
      %553 = vperm.xlu0 %552, %v527
      %v554 = vpop.permute.xlu0 %553
      %557 = vset.pattern.permute.xlu0 0
      %558 = vperm.xlu0 %557, %v528
      %v559 = vpop.permute.xlu0 %558
      %562 = vset.pattern.permute.xlu0 0
      %563 = vperm.xlu0 %562, %v529
      %v564 = vpop.permute.xlu0 %563
      %567 = vset.pattern.permute.xlu0 0
      %568 = vperm.xlu0 %567, %v530
      %v569 = vpop.permute.xlu0 %568
      %572 = vset.pattern.permute.xlu0 0
      %573 = vperm.xlu0 %572, %v531
      %v574 = vpop.permute.xlu0 %573
      %577 = vset.pattern.permute.xlu0 0
      %578 = vperm.xlu0 %577, %v532
      %v579 = vpop.permute.xlu0 %578
      %582 = vset.pattern.permute.xlu0 0
      %583 = vperm.xlu0 %582, %v533
      %v584 = vpop.permute.xlu0 %583
      %587 = vset.pattern.permute.xlu0 0
      %588 = vperm.xlu0 %587, %v534
      %v589 = vpop.permute.xlu0 %588
      %592 = vset.pattern.permute.xlu0 0
      %593 = vperm.xlu0 %592, %v535
      %v594 = vpop.permute.xlu0 %593
      %v608 = vunpack.c.l.b16 %v511
      %v609 = vunpack.c.l.b16 %v512
      %v610 = vunpack.c.l.b16 %v513
      %v611 = vunpack.c.l.b16 %v514
      %v612 = vunpack.c.l.b16 %v515
      %v613 = vunpack.c.l.b16 %v516
      %v614 = vunpack.c.l.b16 %v517
      %v615 = vunpack.c.l.b16 %v518
      %v616 = vunpack.c.l.b16 %v519
      %v617 = vunpack.c.l.b16 %v520
      %v618 = vunpack.c.l.b16 %v521
      %v619 = vunpack.c.l.b16 %v522
      %v620 = vpack.c.b16 %v609, %v608
      %v621 = vpack.c.b16 %v611, %v610
      %v622 = vpack.c.b16 %v613, %v612
      %v623 = vpack.c.b16 %v615, %v614
      %v624 = vpack.c.b16 %v617, %v616
      %v625 = vpack.c.b16 %v619, %v618
      %v627 = vsel %vm297, %v620, 0
      %v630 = vsel %vm297, %v621, 0
      %v633 = vsel %vm297, %v622, 0
      %v636 = vsel %vm297, %v623, 0
      %v639 = vsel %vm297, %v624, 0
      %v642 = vsel %vm297, %v625, 0
      %644 = vmatprep.subr.bf16.mxu0 0
      %645 = vmatpush1.bf16.msra.mxu0 0
      %646 = vmatprep.subr.bf16.mxu0 0
      %647 = vmatpush1.bf16.msra.mxu0 0
      %648 = vmatprep.subr.bf16.mxu0 0
      %649 = vmatpush1.bf16.msra.mxu0 0
      %650 = vmatprep.subr.bf16.mxu0 0
      %651 = vmatpush1.bf16.msra.mxu0 0
      %652 = vmatprep.subr.bf16.mxu0 0
      %653 = vmatpush1.bf16.msra.mxu0 0
      %654 = vmatprep.subr.bf16.mxu0 0
      %655 = vmatpush1.bf16.msra.mxu0 0
      %656 = vmatprep.subr.bf16.mxu0 0
      %657 = vmatpush1.bf16.msra.mxu0 0
      %658 = vmatprep.subr.bf16.mxu0 0
      %659 = vmatpush1.bf16.msra.mxu0 %v523
      %660 = vmatprep.subr.bf16.mxu0 0
      %661 = vmatpush2.bf16.msra.mxu0 0
      %662 = vmatprep.subr.bf16.mxu0 0
      %663 = vmatpush2.bf16.msra.mxu0 0
      %664 = vmatprep.subr.bf16.mxu0 0
      %665 = vmatpush2.bf16.msra.mxu0 0
      %666 = vmatprep.subr.bf16.mxu0 0
      %667 = vmatpush2.bf16.msra.mxu0 0
      %668 = vmatprep.subr.bf16.mxu0 0
      %669 = vmatpush2.bf16.msra.mxu0 0
      %670 = vmatprep.subr.bf16.mxu0 0
      %671 = vmatpush2.bf16.msra.mxu0 0
      %672 = vmatprep.subr.bf16.mxu0 0
      %673 = vmatpush2.bf16.msra.mxu0 0
      %674 = vmatprep.subr.bf16.mxu0 0
      %675 = vmatpush2.bf16.msra.mxu0 0
      %676 = vmatprep.mubr.bf16.mxu0 0
      %677 = vmatmul.mubr.bf16.gmra.mxu0 %v627
      %v678 = vpop.f32.mrf.mxu0
      %v679 = vadd.f32 %v539, %v678
      %v680 = vpop.f32.mrf.mxu0
      %v681 = vpop.f32.mrf.mxu0
      %v682 = vadd.f32 %v544, %v681
      %v683 = vpop.f32.mrf.mxu0
      %684 = vmatprep.mubr.bf16.mxu0 0
      %685 = vmatmul.mubr.bf16.gmra.mxu0 %v630
      %v686 = vpop.f32.mrf.mxu0
      %v687 = vadd.f32 %v549, %v686
      %v688 = vpop.f32.mrf.mxu0
      %v689 = vpop.f32.mrf.mxu0
      %v690 = vadd.f32 %v554, %v689
      %v691 = vpop.f32.mrf.mxu0
      %692 = vmatprep.mubr.bf16.mxu0 0
      %693 = vmatmul.mubr.bf16.gmra.mxu0 %v633
      %v694 = vpop.f32.mrf.mxu0
      %v695 = vadd.f32 %v559, %v694
      %v696 = vpop.f32.mrf.mxu0
      %v697 = vpop.f32.mrf.mxu0
      %v698 = vadd.f32 %v564, %v697
      %v699 = vpop.f32.mrf.mxu0
      %700 = vmatprep.mubr.bf16.mxu0 0
      %701 = vmatmul.mubr.bf16.gmra.mxu0 %v636
      %v702 = vpop.f32.mrf.mxu0
      %v703 = vadd.f32 %v569, %v702
      %v704 = vpop.f32.mrf.mxu0
      %v705 = vpop.f32.mrf.mxu0
      %v706 = vadd.f32 %v574, %v705
      %v707 = vpop.f32.mrf.mxu0
      %708 = vmatprep.mubr.bf16.mxu0 0
      %709 = vmatmul.mubr.bf16.gmra.mxu0 %v639
      %v710 = vpop.f32.mrf.mxu0
      %v711 = vadd.f32 %v579, %v710
      %v712 = vpop.f32.mrf.mxu0
      %v713 = vpop.f32.mrf.mxu0
      %v714 = vadd.f32 %v584, %v713
      %v715 = vpop.f32.mrf.mxu0
      %716 = vmatprep.mubr.bf16.mxu0 0
      %717 = vmatmul.mubr.bf16.gmra.mxu0 %v642
      %v718 = vpop.f32.mrf.mxu0
      %v719 = vadd.f32 %v589, %v718
      %v720 = vpop.f32.mrf.mxu0
      %v721 = vpop.f32.mrf.mxu0
      %v722 = vadd.f32 %v594, %v721
      %v723 = vpop.f32.mrf.mxu0
      %724 = vdwg.mxu0
      %v725 = vpack.c.bf16 %v682, %v679
      %v726 = vpack.c.bf16 %v690, %v687
      %v727 = vpack.c.bf16 %v698, %v695
      %v728 = vpack.c.bf16 %v706, %v703
      %v729 = vpack.c.bf16 %v714, %v711
      %v730 = vpack.c.bf16 %v722, %v719
      %v737 = vunpack.c.l.b16 %v725
      %v738 = vunpack.c.h.b16 %v725
      %v739 = vunpack.c.l.b16 %v726
      %v740 = vunpack.c.h.b16 %v726
      %v741 = vunpack.c.l.b16 %v727
      %v742 = vunpack.c.h.b16 %v727
      %v743 = vunpack.c.l.b16 %v728
      %v744 = vunpack.c.h.b16 %v728
      %v745 = vunpack.c.l.b16 %v729
      %v746 = vunpack.c.h.b16 %v729
      %v747 = vunpack.c.l.b16 %v730
      %v748 = vunpack.c.h.b16 %v730
      %v749 = vpack.c.b16 %v737, %v737
      %v750 = vpack.c.b16 %v738, %v738
      %v751 = vpack.c.b16 %v739, %v739
      %v752 = vpack.c.b16 %v740, %v740
      %v753 = vpack.c.b16 %v741, %v741
      %v754 = vpack.c.b16 %v742, %v742
      %v755 = vpack.c.b16 %v743, %v743
      %v756 = vpack.c.b16 %v744, %v744
      %v757 = vpack.c.b16 %v745, %v745
      %v758 = vpack.c.b16 %v746, %v746
      %v759 = vpack.c.b16 %v747, %v747
      %v760 = vpack.c.b16 %v748, %v748
      %vm773 = vcmask 519168
      %774 = vst.msk [vmem:[%s286] sm:$0xf] %vm773, %v749
      %775 = vst.msk [vmem:[%s286 + $0x4] sm:$0xf] %vm773, %v750
      %776 = vst.msk [vmem:[%s286 + $0x8] sm:$0xf] %vm773, %v751
      %777 = vst.msk [vmem:[%s286 + $0xc] sm:$0xf] %vm773, %v752
      %778 = vst.msk [vmem:[%s286 + $0x10] sm:$0xf] %vm773, %v753
      %779 = vst.msk [vmem:[%s286 + $0x14] sm:$0xf] %vm773, %v754
      %780 = vst.msk [vmem:[%s286 + $0x18] sm:$0xf] %vm773, %v755
      %781 = vst.msk [vmem:[%s286 + $0x1c] sm:$0xf] %vm773, %v756
      %782 = vst.msk [vmem:[%s286 + $0x20] sm:$0xf] %vm773, %v757
      %783 = vst.msk [vmem:[%s286 + $0x24] sm:$0xf] %vm773, %v758
      %784 = vst.msk [vmem:[%s286 + $0x28] sm:$0xf] %vm773, %v759
      %785 = vst.msk [vmem:[%s286 + $0x2c] sm:$0xf] %vm773, %v760
      %p786 = scmp.lt.s32.totalorder %s19, 1
      %s787 = scalar_select %p786, %s19, 1
      %s788 = smul.addr %s787, 12
      %s789 = smul.addr %s788, 4
      %s790 = scalar_lea.vmem %s6, %s789
      %p791 = scmp.lt.s32.totalorder %s19, 1
      %s792 = scalar_select %p791, %s19, 1
      %s793 = smul.addr %s792, 2
      %s794 = smul.addr %s793, 8
      %s795 = scalar_lea.vmem %s7, %s794
      // Predicated region
      $region45: #{atten_block_forward.2} parent=43 // pred_check
        %p796 = pneg %p168
      $region46: #{atten_block_forward.2} parent=43 // pred_check_branch
        %798 = sbr.rel (%p796) target = $region48
      $region47: #{atten_block_forward.2} parent=43 // pred_region
        _
      $region48: #{atten_block_forward.2} parent=43 // pred_fallthru
        _
      // Predicated region
      $region49: #{atten_block_forward.2} parent=43 // pred_check
        %p799 = pneg %p194
      $region50: #{atten_block_forward.2} parent=43 // pred_check_branch
        %801 = sbr.rel (%p799) target = $region52
      $region51: #{atten_block_forward.2} parent=43 // pred_region
        _
      $region52: #{atten_block_forward.2} parent=43 // pred_fallthru
        _
    $region44: #{atten_block_forward.2} parent=5 // pred_fallthru
      _
    %p802 = scmp.le.s32.totalorder 2, %s14
    // Predicated region
    $region53: #{atten_block_forward.2} parent=5 // pred_check
      %p803 = pneg %p802
    $region54: #{atten_block_forward.2} parent=5 // pred_check_branch
      %805 = sbr.rel (%p803) target = $region56
    $region55: #{atten_block_forward.2} parent=5 // pred_region
      %s806 = ssub.s32 %s14, 2
      // Predicated region
      $region57: #{atten_block_forward.2} parent=55 // pred_check
        %p807 = pneg %p174
      $region58: #{atten_block_forward.2} parent=55 // pred_check_branch
        %809 = sbr.rel (%p807) target = $region60
      $region59: #{atten_block_forward.2} parent=55 // pred_region
        %p810 = scmp.lt.s32.totalorder %s20, 1
        %s811 = scalar_select %p810, %s20, 1
        %s812 = smul.addr %s811, 12
        %s813 = smul.addr %s812, 4
        %s814 = scalar_lea.vmem %s6, %s813
      $region60: #{atten_block_forward.2} parent=55 // pred_fallthru
        _
      // Predicated region
      $region61: #{atten_block_forward.2} parent=55 // pred_check
        %p815 = pneg %p200
      $region62: #{atten_block_forward.2} parent=55 // pred_check_branch
        %817 = sbr.rel (%p815) target = $region64
      $region63: #{atten_block_forward.2} parent=55 // pred_region
        %p818 = scmp.lt.s32.totalorder %s20, 1
        %s819 = scalar_select %p818, %s20, 1
        %s820 = smul.addr %s819, 2
        %s821 = smul.addr %s820, 8
        %s822 = scalar_lea.vmem %s7, %s821
      $region64: #{atten_block_forward.2} parent=55 // pred_fallthru
        _
    $region56: #{atten_block_forward.2} parent=5 // pred_fallthru
      _
  $region6: #{atten_block_forward.2} parent=0 // loop_footer
    %s18 = sadd.s32 1, %s14
  $region7: #{atten_block_forward.2} parent=0 // loop_footer_branch
    %13 = sbr.rel target = $region3
  $region8: #{atten_block_forward.2} parent=0 // loop_exit
    _

// kernel: atten_block_forward.3
$region0: #{atten_block_forward.3}
  #allocation0 [shape = 'u32[]', space=smem, size = 0x4, offset = 0x4, fixed_abs, tag = 'smem constant byte address 0x4 - core index']
  #allocation1 [shape = 'u32[144,128]{1,0:T(1,128)}', space=vmem, size = 0x12000, scoped, tag = 'internal scratch']
  %s0 = inlined_call_operand.vmem [shape: bf16[2,4,64,8], index: 0, kind: input, shape index: {}]
  %s1 = inlined_call_operand.vmem [shape: bf16[2,4,64,8], index: 1, kind: input, shape index: {}]
  %s2 = inlined_call_operand.vmem [shape: bf16[2,4,8,64], index: 2, kind: input, shape index: {}]
  %s3 = inlined_call_operand.vmem [shape: f32[2,16,64], index: 3, kind: input, shape index: {}]
  %s4 = inlined_call_operand.vmem [shape: bf16[4,16,8], index: 4, kind: input, shape index: {}]
  %s5 = inlined_call_operand.vmem [shape: f32[16,1], index: 5, kind: input, shape index: {}]
  %s6 = inlined_call_operand.vmem [shape: f32[2,16,64], index: 6, kind: output, shape index: {}]
  %s7 = sld [smem:[#allocation0]]
  $region57: #{atten_block_forward.3} parent=0
    _
  %s9 = ssub.s32 1, %s7
  %s10 = scalar_select 0, %s9, %s7
  loop: start=0, step=1, limit=4
  $region2: #{atten_block_forward.3} parent=0 // loop_pre_header
    _
  $region3: #{atten_block_forward.3} parent=0 // loop_header
    %s12 = sphi 0, %s16
    %p13 = scmp.ge.s32.totalorder %s12, 4
    %s22 = sphi 0, %s24
    %s25 = sphi 0, %s22
    %s26 = sphi 0, %s25
    %s42 = sphi 0, %s26
    %s48 = sphi 0, %s50
    %s51 = sphi 0, %s48
    %s52 = sphi 0, %s51
    %s68 = sphi 0, %s52
    %s74 = sphi 0, %s76
    %s77 = sphi 0, %s74
    %s78 = sphi 0, %s77
    %s94 = sphi 0, %s78
    %s100 = sphi 0, %s102
    %s103 = sphi 0, %s100
    %s104 = sphi 0, %s103
    %s120 = sphi 0, %s104
    %s124 = sphi 0, %s124
    %s126 = sphi 0, %s124
    %s127 = sphi 0, %s126
    %s141 = sphi 0, %s127
    %s145 = sphi 0, %s145
    %s147 = sphi 0, %s145
    %s148 = sphi 0, %s147
    %s162 = sphi 0, %s148
    %s168 = sphi 0, %s170
    %s171 = sphi 0, %s168
    %s172 = sphi 0, %s171
    %s188 = sphi 0, %s172
  $region4: #{atten_block_forward.3} parent=0 // loop_header_branch
    %15 = sbr.rel (%p13) target = $region8
  $region5: #{atten_block_forward.3} parent=0 // loop_body
    %s17 = ssub.s32 %s12, 1
    %s18 = ssub.s32 %s12, 2
    %s19 = sadd.s32 %s12, 1
    %s20 = ssub.s32 %s12, %s19
    %p21 = scmp.eq.s32.totalorder %s20, 0
    %s23 = sadd.s32 %s22, 1
    %s24 = scalar_select %p21, %s22, %s23
    %p27 = pneg %p21
    %p28 = scmp.eq.s32.totalorder %s12, 1
    %p29 = por %p27, %p28
    %p30 = scmp.ne.s32.totalorder %s22, %s25
    %p31 = scmp.eq.s32.totalorder %s12, 0
    %p32 = por %p30, %p31
    %p33 = scmp.ne.s32.totalorder %s22, %s25
    %p34 = scmp.eq.s32.totalorder %s17, 1
    %p35 = por %p33, %p34
    %p36 = scmp.ne.s32.totalorder %s25, %s26
    %p37 = scmp.eq.s32.totalorder %s17, 0
    %p38 = por %p36, %p37
    %p39 = scmp.ne.s32.totalorder %s25, %s26
    %p40 = scmp.eq.s32.totalorder %s18, 1
    %p41 = por %p39, %p40
    %p43 = scmp.ne.s32.totalorder %s26, %s42
    %p44 = scmp.eq.s32.totalorder %s18, 0
    %p45 = por %p43, %p44
    %s46 = ssub.s32 %s12, %s19
    %p47 = scmp.eq.s32.totalorder %s46, 0
    %s49 = sadd.s32 %s48, 1
    %s50 = scalar_select %p47, %s48, %s49
    %p53 = pneg %p47
    %p54 = scmp.eq.s32.totalorder %s12, 1
    %p55 = por %p53, %p54
    %p56 = scmp.ne.s32.totalorder %s48, %s51
    %p57 = scmp.eq.s32.totalorder %s12, 0
    %p58 = por %p56, %p57
    %p59 = scmp.ne.s32.totalorder %s48, %s51
    %p60 = scmp.eq.s32.totalorder %s17, 1
    %p61 = por %p59, %p60
    %p62 = scmp.ne.s32.totalorder %s51, %s52
    %p63 = scmp.eq.s32.totalorder %s17, 0
    %p64 = por %p62, %p63
    %p65 = scmp.ne.s32.totalorder %s51, %s52
    %p66 = scmp.eq.s32.totalorder %s18, 1
    %p67 = por %p65, %p66
    %p69 = scmp.ne.s32.totalorder %s52, %s68
    %p70 = scmp.eq.s32.totalorder %s18, 0
    %p71 = por %p69, %p70
    %s72 = ssub.s32 %s12, %s19
    %p73 = scmp.eq.s32.totalorder %s72, 0
    %s75 = sadd.s32 %s74, 1
    %s76 = scalar_select %p73, %s74, %s75
    %p79 = pneg %p73
    %p80 = scmp.eq.s32.totalorder %s12, 1
    %p81 = por %p79, %p80
    %p82 = scmp.ne.s32.totalorder %s74, %s77
    %p83 = scmp.eq.s32.totalorder %s12, 0
    %p84 = por %p82, %p83
    %p85 = scmp.ne.s32.totalorder %s74, %s77
    %p86 = scmp.eq.s32.totalorder %s17, 1
    %p87 = por %p85, %p86
    %p88 = scmp.ne.s32.totalorder %s77, %s78
    %p89 = scmp.eq.s32.totalorder %s17, 0
    %p90 = por %p88, %p89
    %p91 = scmp.ne.s32.totalorder %s77, %s78
    %p92 = scmp.eq.s32.totalorder %s18, 1
    %p93 = por %p91, %p92
    %p95 = scmp.ne.s32.totalorder %s78, %s94
    %p96 = scmp.eq.s32.totalorder %s18, 0
    %p97 = por %p95, %p96
    %s98 = ssub.s32 %s12, %s19
    %p99 = scmp.eq.s32.totalorder %s98, 0
    %s101 = sadd.s32 %s100, 1
    %s102 = scalar_select %p99, %s100, %s101
    %p105 = pneg %p99
    %p106 = scmp.eq.s32.totalorder %s12, 1
    %p107 = por %p105, %p106
    %p108 = scmp.ne.s32.totalorder %s100, %s103
    %p109 = scmp.eq.s32.totalorder %s12, 0
    %p110 = por %p108, %p109
    %p111 = scmp.ne.s32.totalorder %s100, %s103
    %p112 = scmp.eq.s32.totalorder %s17, 1
    %p113 = por %p111, %p112
    %p114 = scmp.ne.s32.totalorder %s103, %s104
    %p115 = scmp.eq.s32.totalorder %s17, 0
    %p116 = por %p114, %p115
    %p117 = scmp.ne.s32.totalorder %s103, %s104
    %p118 = scmp.eq.s32.totalorder %s18, 1
    %p119 = por %p117, %p118
    %p121 = scmp.ne.s32.totalorder %s104, %s120
    %p122 = scmp.eq.s32.totalorder %s18, 0
    %p123 = por %p121, %p122
    %s125 = sadd.s32 %s124, 1
    %p128 = scmp.eq.s32.totalorder %s12, 1
    %p129 = scmp.ne.s32.totalorder %s124, %s126
    %p130 = scmp.eq.s32.totalorder %s12, 0
    %p131 = por %p129, %p130
    %p132 = scmp.ne.s32.totalorder %s124, %s126
    %p133 = scmp.eq.s32.totalorder %s17, 1
    %p134 = por %p132, %p133
    %p135 = scmp.ne.s32.totalorder %s126, %s127
    %p136 = scmp.eq.s32.totalorder %s17, 0
    %p137 = por %p135, %p136
    %p138 = scmp.ne.s32.totalorder %s126, %s127
    %p139 = scmp.eq.s32.totalorder %s18, 1
    %p140 = por %p138, %p139
    %p142 = scmp.ne.s32.totalorder %s127, %s141
    %p143 = scmp.eq.s32.totalorder %s18, 0
    %p144 = por %p142, %p143
    %s146 = sadd.s32 %s145, 1
    %p149 = scmp.eq.s32.totalorder %s12, 1
    %p150 = scmp.ne.s32.totalorder %s145, %s147
    %p151 = scmp.eq.s32.totalorder %s12, 0
    %p152 = por %p150, %p151
    %p153 = scmp.ne.s32.totalorder %s145, %s147
    %p154 = scmp.eq.s32.totalorder %s17, 1
    %p155 = por %p153, %p154
    %p156 = scmp.ne.s32.totalorder %s147, %s148
    %p157 = scmp.eq.s32.totalorder %s17, 0
    %p158 = por %p156, %p157
    %p159 = scmp.ne.s32.totalorder %s147, %s148
    %p160 = scmp.eq.s32.totalorder %s18, 1
    %p161 = por %p159, %p160
    %p163 = scmp.ne.s32.totalorder %s148, %s162
    %p164 = scmp.eq.s32.totalorder %s18, 0
    %p165 = por %p163, %p164
    %s166 = ssub.s32 %s12, %s19
    %p167 = scmp.eq.s32.totalorder %s166, 0
    %s169 = sadd.s32 %s168, 1
    %s170 = scalar_select %p167, %s168, %s169
    %p173 = pneg %p167
    %p174 = scmp.eq.s32.totalorder %s12, 1
    %p175 = por %p173, %p174
    %p176 = scmp.ne.s32.totalorder %s168, %s171
    %p177 = scmp.eq.s32.totalorder %s12, 0
    %p178 = por %p176, %p177
    %p179 = scmp.ne.s32.totalorder %s168, %s171
    %p180 = scmp.eq.s32.totalorder %s17, 1
    %p181 = por %p179, %p180
    %p182 = scmp.ne.s32.totalorder %s171, %s172
    %p183 = scmp.eq.s32.totalorder %s17, 0
    %p184 = por %p182, %p183
    %p185 = scmp.ne.s32.totalorder %s171, %s172
    %p186 = scmp.eq.s32.totalorder %s18, 1
    %p187 = por %p185, %p186
    %p189 = scmp.ne.s32.totalorder %s172, %s188
    %p190 = scmp.eq.s32.totalorder %s18, 0
    %p191 = por %p189, %p190
    %p192 = scmp.le.s32.totalorder 1, %s12
    %p193 = scmp.lt.s32.totalorder %s12, 3
    %p194 = pnand %p192, %p193
    %p195 = pneg %p194
    // Predicated region
    $region9: #{atten_block_forward.3} parent=5 // pred_check
      _
    $region10: #{atten_block_forward.3} parent=5 // pred_check_branch
      %197 = sbr.rel (%p194) target = $region12
    $region11: #{atten_block_forward.3} parent=5 // pred_region
      %s198 = ssub.s32 %s12, 1
      // Predicated region
      $region13: #{atten_block_forward.3} parent=11 // pred_check
        %p199 = pneg %p137
      $region14: #{atten_block_forward.3} parent=11 // pred_check_branch
        %201 = sbr.rel (%p199) target = $region16
      $region15: #{atten_block_forward.3} parent=11 // pred_region
        _
      $region16: #{atten_block_forward.3} parent=11 // pred_fallthru
        _
      // Predicated region
      $region17: #{atten_block_forward.3} parent=11 // pred_check
        %p202 = pneg %p158
      $region18: #{atten_block_forward.3} parent=11 // pred_check_branch
        %204 = sbr.rel (%p202) target = $region20
      $region19: #{atten_block_forward.3} parent=11 // pred_region
        _
      $region20: #{atten_block_forward.3} parent=11 // pred_fallthru
        _
    $region12: #{atten_block_forward.3} parent=5 // pred_fallthru
      _
    %p205 = scmp.lt.s32.totalorder %s12, 2
    // Predicated region
    $region21: #{atten_block_forward.3} parent=5 // pred_check
      %p206 = pneg %p205
    $region22: #{atten_block_forward.3} parent=5 // pred_check_branch
      %208 = sbr.rel (%p206) target = $region24
    $region23: #{atten_block_forward.3} parent=5 // pred_region
      // Predicated region
      $region25: #{atten_block_forward.3} parent=23 // pred_check
        %p209 = pneg %p32
      $region26: #{atten_block_forward.3} parent=23 // pred_check_branch
        %211 = sbr.rel (%p209) target = $region28
      $region27: #{atten_block_forward.3} parent=23 // pred_region
        %p212 = scmp.lt.s32.totalorder %s12, 1
        %s213 = scalar_select %p212, %s12, 1
        %s214 = smul.addr %s213, 32
        %s215 = smul.addr %s214, 4
        %s216 = scalar_lea.vmem %s0, %s215
      $region28: #{atten_block_forward.3} parent=23 // pred_fallthru
        _
      // Predicated region
      $region29: #{atten_block_forward.3} parent=23 // pred_check
        %p217 = pneg %p58
      $region30: #{atten_block_forward.3} parent=23 // pred_check_branch
        %219 = sbr.rel (%p217) target = $region32
      $region31: #{atten_block_forward.3} parent=23 // pred_region
        %p220 = scmp.lt.s32.totalorder %s12, 1
        %s221 = scalar_select %p220, %s12, 1
        %s222 = smul.addr %s221, 32
        %s223 = smul.addr %s222, 4
        %s224 = scalar_lea.vmem %s1, %s223
      $region32: #{atten_block_forward.3} parent=23 // pred_fallthru
        _
      // Predicated region
      $region33: #{atten_block_forward.3} parent=23 // pred_check
        %p225 = pneg %p84
      $region34: #{atten_block_forward.3} parent=23 // pred_check_branch
        %227 = sbr.rel (%p225) target = $region36
      $region35: #{atten_block_forward.3} parent=23 // pred_region
        %p228 = scmp.lt.s32.totalorder %s12, 1
        %s229 = scalar_select %p228, %s12, 1
        %s230 = smul.addr %s229, 4
        %s231 = smul.addr %s230, 4
        %s232 = scalar_lea.vmem %s2, %s231
      $region36: #{atten_block_forward.3} parent=23 // pred_fallthru
        _
      // Predicated region
      $region37: #{atten_block_forward.3} parent=23 // pred_check
        %p233 = pneg %p110
      $region38: #{atten_block_forward.3} parent=23 // pred_check_branch
        %235 = sbr.rel (%p233) target = $region40
      $region39: #{atten_block_forward.3} parent=23 // pred_region
        %p236 = scmp.lt.s32.totalorder %s12, 1
        %s237 = scalar_select %p236, %s12, 1
        %s238 = smul.addr %s237, 2
        %s239 = smul.addr %s238, 8
        %s240 = scalar_lea.vmem %s3, %s239
      $region40: #{atten_block_forward.3} parent=23 // pred_fallthru
        _
    $region24: #{atten_block_forward.3} parent=5 // pred_fallthru
      _
    %p241 = scmp.le.s32.totalorder 1, %s12
    %p242 = scmp.lt.s32.totalorder %s12, 3
    %p243 = pnand %p241, %p242
    %p244 = pneg %p243
    // Predicated region
    $region41: #{atten_block_forward.3} parent=5 // pred_check
      _
    $region42: #{atten_block_forward.3} parent=5 // pred_check_branch
      %246 = sbr.rel (%p243) target = $region44
    $region43: #{atten_block_forward.3} parent=5 // pred_region
      %s247 = ssub.s32 %s12, 1
      %p248 = scmp.lt.s32.totalorder %s17, 1
      %s249 = scalar_select %p248, %s17, 1
      %s250 = smul.addr %s249, 32
      %s251 = smul.addr %s250, 4
      %s252 = scalar_lea.vmem %s0, %s251
      %p253 = pneg %p38
      %p254 = pneg %p35
      %p255 = scmp.lt.s32.totalorder %s17, 1
      %s256 = scalar_select %p255, %s17, 1
      %s257 = smul.addr %s256, 32
      %s258 = smul.addr %s257, 4
      %s259 = scalar_lea.vmem %s1, %s258
      %p260 = pneg %p64
      %p261 = pneg %p61
      %p262 = scmp.lt.s32.totalorder %s17, 1
      %s263 = scalar_select %p262, %s17, 1
      %s264 = smul.addr %s263, 4
      %s265 = smul.addr %s264, 4
      %s266 = scalar_lea.vmem %s2, %s265
      %p267 = pneg %p90
      %p268 = pneg %p87
      %p269 = scmp.lt.s32.totalorder %s17, 1
      %s270 = scalar_select %p269, %s17, 1
      %s271 = smul.addr %s270, 2
      %s272 = smul.addr %s271, 8
      %s273 = scalar_lea.vmem %s3, %s272
      %p274 = pneg %p116
      %p275 = pneg %p113
      %p276 = pneg %p137
      %p277 = pneg %p134
      %p278 = pneg %p158
      %p279 = pneg %p155
      %p280 = pneg %p184
      %p281 = pneg %p181
      %p282 = scmp.lt.s32.totalorder %s17, 1
      %s283 = scalar_select %p282, %s17, 1
      %s284 = smul.addr %s283, 2
      %s285 = smul.addr %s284, 8
      %s286 = scalar_lea.vmem %s6, %s285
      %p287 = scmp.lt.s32.totalorder %s17, 1
      %s288 = scalar_select %p287, %s17, 1
      %s289 = smul.addr %s288, 32
      %s290 = smul.addr %s289, 4
      %s291 = scalar_lea.vmem %s0, %s290
      %p292 = scmp.lt.s32.totalorder %s17, 1
      %s293 = scalar_select %p292, %s17, 1
      %s294 = smul.addr %s293, 32
      %s295 = smul.addr %s294, 4
      %s296 = scalar_lea.vmem %s1, %s295
      %p297 = scmp.lt.s32.totalorder %s17, 1
      %s298 = scalar_select %p297, %s17, 1
      %s299 = smul.addr %s298, 4
      %s300 = smul.addr %s299, 4
      %s301 = scalar_lea.vmem %s2, %s300
      %p302 = scmp.lt.s32.totalorder %s17, 1
      %s303 = scalar_select %p302, %s17, 1
      %s304 = smul.addr %s303, 2
      %s305 = smul.addr %s304, 8
      %s306 = scalar_lea.vmem %s3, %s305
      %p307 = scmp.lt.s32.totalorder %s17, 1
      %s308 = scalar_select %p307, %s17, 1
      %s309 = smul.addr %s308, 2
      %s310 = smul.addr %s309, 8
      %s311 = scalar_lea.vmem %s6, %s310
      %v313 = vld [vmem:[%s306] sm:$0xff]
      %v314 = vld [vmem:[%s306 + $0x8] sm:$0xff]
      %v315 = vld [vmem:[%s5] sm:$0xff]
      %v316 = vld [vmem:[%s5 + $0x8] sm:$0xff]
      %318 = vset.pattern.permute.xlu0 0
      %319 = vperm.xlu0 %318, %v315
      %v320 = vpop.permute.xlu0 %319
      %323 = vset.pattern.permute.xlu0 0
      %324 = vperm.xlu0 %323, %v316
      %v325 = vpop.permute.xlu0 %324
      %v327 = vadd.f32 %v313, %v320
      %v328 = vadd.f32 %v314, %v325
      %v329 = vld [vmem:[%s291] sm:$0xf]
      %v330 = vld [vmem:[%s291 + $0x4] sm:$0xf]
      %v331 = vld [vmem:[%s291 + $0x8] sm:$0xf]
      %v332 = vld [vmem:[%s291 + $0xc] sm:$0xf]
      %v333 = vld [vmem:[%s291 + $0x10] sm:$0xf]
      %v334 = vld [vmem:[%s291 + $0x14] sm:$0xf]
      %v335 = vld [vmem:[%s291 + $0x18] sm:$0xf]
      %v336 = vld [vmem:[%s291 + $0x1c] sm:$0xf]
      %v337 = vld [vmem:[%s296] sm:$0xf]
      %v338 = vld [vmem:[%s296 + $0x4] sm:$0xf]
      %v339 = vld [vmem:[%s296 + $0x8] sm:$0xf]
      %v340 = vld [vmem:[%s296 + $0xc] sm:$0xf]
      %v341 = vld [vmem:[%s296 + $0x10] sm:$0xf]
      %v342 = vld [vmem:[%s296 + $0x14] sm:$0xf]
      %v343 = vld [vmem:[%s296 + $0x18] sm:$0xf]
      %v344 = vld [vmem:[%s296 + $0x1c] sm:$0xf]
      %v345 = vld [vmem:[%s301] sm:$0xf]
      %v354 = vunpack.c.l.b16 %v337
      %v355 = vunpack.c.l.b16 %v338
      %v356 = vunpack.c.l.b16 %v339
      %v357 = vunpack.c.l.b16 %v340
      %v358 = vunpack.c.l.b16 %v341
      %v359 = vunpack.c.l.b16 %v342
      %v360 = vunpack.c.l.b16 %v343
      %v361 = vunpack.c.l.b16 %v344
      %v362 = vpack.c.b16 %v355, %v354
      %v363 = vpack.c.b16 %v357, %v356
      %v364 = vpack.c.b16 %v359, %v358
      %v365 = vpack.c.b16 %v361, %v360
      %v374 = vunpack.c.l.b16 %v329
      %v375 = vunpack.c.l.b16 %v330
      %v376 = vunpack.c.l.b16 %v331
      %v377 = vunpack.c.l.b16 %v332
      %v378 = vunpack.c.l.b16 %v333
      %v379 = vunpack.c.l.b16 %v334
      %v380 = vunpack.c.l.b16 %v335
      %v381 = vunpack.c.l.b16 %v336
      %v382 = vpack.c.b16 %v375, %v374
      %v383 = vpack.c.b16 %v377, %v376
      %v384 = vpack.c.b16 %v379, %v378
      %v385 = vpack.c.b16 %v381, %v380
      %vm386 = vcmask 64512
      %v388 = vsel %vm386, %v362, 0
      %v391 = vsel %vm386, %v363, 0
      %v394 = vsel %vm386, %v364, 0
      %v397 = vsel %vm386, %v365, 0
      %v400 = vsel %vm386, %v382, 0
      %v403 = vsel %vm386, %v383, 0
      %v406 = vsel %vm386, %v384, 0
      %v409 = vsel %vm386, %v385, 0
      %411 = vmatprep.subr.bf16.mxu0 0
      %412 = vmatpush1.bf16.xpose.msra.mxu0 0
      %413 = vmatprep.subr.bf16.mxu0 0
      %414 = vmatpush1.bf16.xpose.msra.mxu0 0
      %415 = vmatprep.subr.bf16.mxu0 0
      %416 = vmatpush1.bf16.xpose.msra.mxu0 0
      %417 = vmatprep.subr.bf16.mxu0 0
      %418 = vmatpush1.bf16.xpose.msra.mxu0 0
      %419 = vmatprep.subr.bf16.mxu0 0
      %420 = vmatpush1.bf16.xpose.msra.mxu0 %v409
      %421 = vmatprep.subr.bf16.mxu0 0
      %422 = vmatpush1.bf16.xpose.msra.mxu0 %v406
      %423 = vmatprep.subr.bf16.mxu0 0
      %424 = vmatpush1.bf16.xpose.msra.mxu0 %v403
      %425 = vmatprep.subr.bf16.mxu0 0
      %426 = vmatpush1.bf16.xpose.msra.mxu0 %v400
      %427 = vmatprep.subr.bf16.mxu0 0
      %428 = vmatpush2.bf16.xpose.msra.mxu0 0
      %429 = vmatprep.subr.bf16.mxu0 0
      %430 = vmatpush2.bf16.xpose.msra.mxu0 0
      %431 = vmatprep.subr.bf16.mxu0 0
      %432 = vmatpush2.bf16.xpose.msra.mxu0 0
      %433 = vmatprep.subr.bf16.mxu0 0
      %434 = vmatpush2.bf16.xpose.msra.mxu0 0
      %435 = vmatprep.subr.bf16.mxu0 0
      %436 = vmatpush2.bf16.xpose.msra.mxu0 0
      %437 = vmatprep.subr.bf16.mxu0 0
      %438 = vmatpush2.bf16.xpose.msra.mxu0 0
      %439 = vmatprep.subr.bf16.mxu0 0
      %440 = vmatpush2.bf16.xpose.msra.mxu0 0
      %441 = vmatprep.subr.bf16.mxu0 0
      %442 = vmatpush2.bf16.xpose.msra.mxu0 0
      %443 = vmatprep.mubr.bf16.mxu0 0
      %444 = vmatmul.mubr.bf16.gmra.mxu0 %v388
      %v445 = vpop.f32.mrf.mxu0
      %v446 = vadd.f32 0.0, %v445
      %v447 = vpop.f32.mrf.mxu0
      %v448 = vpop.f32.mrf.mxu0
      %v449 = vadd.f32 0.0, %v448
      %v450 = vpop.f32.mrf.mxu0
      %451 = vmatprep.mubr.bf16.mxu0 0
      %452 = vmatmul.mubr.bf16.gmra.mxu0 %v391
      %v453 = vpop.f32.mrf.mxu0
      %v454 = vadd.f32 0.0, %v453
      %v455 = vpop.f32.mrf.mxu0
      %v456 = vpop.f32.mrf.mxu0
      %v457 = vadd.f32 0.0, %v456
      %v458 = vpop.f32.mrf.mxu0
      %459 = vmatprep.mubr.bf16.mxu0 0
      %460 = vmatmul.mubr.bf16.gmra.mxu0 %v394
      %v461 = vpop.f32.mrf.mxu0
      %v462 = vadd.f32 0.0, %v461
      %v463 = vpop.f32.mrf.mxu0
      %v464 = vpop.f32.mrf.mxu0
      %v465 = vadd.f32 0.0, %v464
      %v466 = vpop.f32.mrf.mxu0
      %467 = vmatprep.mubr.bf16.mxu0 0
      %468 = vmatmul.mubr.bf16.gmra.mxu0 %v397
      %v469 = vpop.f32.mrf.mxu0
      %v470 = vadd.f32 0.0, %v469
      %v471 = vpop.f32.mrf.mxu0
      %v472 = vpop.f32.mrf.mxu0
      %v473 = vadd.f32 0.0, %v472
      %v474 = vpop.f32.mrf.mxu0
      %475 = vdwg.mxu0
      %vm476 = vcmask 523264
      %v477 = vsel %vm476, %v446, -inf
      %478 = vmax.xlane.f32.xlu0 %v477
      %v479 = vpop.xlane.xlu0 %478
      %v480 = vsel %vm476, %v449, -inf
      %481 = vmax.xlane.f32.xlu0 %v480
      %v482 = vpop.xlane.xlu0 %481
      %v483 = vsel %vm476, %v454, -inf
      %484 = vmax.xlane.f32.xlu0 %v483
      %v485 = vpop.xlane.xlu0 %484
      %v486 = vsel %vm476, %v457, -inf
      %487 = vmax.xlane.f32.xlu0 %v486
      %v488 = vpop.xlane.xlu0 %487
      %v489 = vsel %vm476, %v462, -inf
      %490 = vmax.xlane.f32.xlu0 %v489
      %v491 = vpop.xlane.xlu0 %490
      %v492 = vsel %vm476, %v465, -inf
      %493 = vmax.xlane.f32.xlu0 %v492
      %v494 = vpop.xlane.xlu0 %493
      %v495 = vsel %vm476, %v470, -inf
      %496 = vmax.xlane.f32.xlu0 %v495
      %v497 = vpop.xlane.xlu0 %496
      %v498 = vsel %vm476, %v473, -inf
      %499 = vmax.xlane.f32.xlu0 %v498
      %v500 = vpop.xlane.xlu0 %499
      %v501 = vsub.f32 %v446, %v479
      %v502 = vsub.f32 %v449, %v482
      %v503 = vsub.f32 %v454, %v485
      %v504 = vsub.f32 %v457, %v488
      %v505 = vsub.f32 %v462, %v491
      %v506 = vsub.f32 %v465, %v494
      %v507 = vsub.f32 %v470, %v497
      %v508 = vsub.f32 %v473, %v500
      %v509 = vmul.f32 %v501, 1.442695
      %v510 = vpow.pop %v509
      %v511 = vmul.f32 %v502, 1.442695
      %v512 = vpow.pop %v511
      %v513 = vmul.f32 %v503, 1.442695
      %v514 = vpow.pop %v513
      %v515 = vmul.f32 %v504, 1.442695
      %v516 = vpow.pop %v515
      %v517 = vmul.f32 %v505, 1.442695
      %v518 = vpow.pop %v517
      %v519 = vmul.f32 %v506, 1.442695
      %v520 = vpow.pop %v519
      %v521 = vmul.f32 %v507, 1.442695
      %v522 = vpow.pop %v521
      %v523 = vmul.f32 %v508, 1.442695
      %v524 = vpow.pop %v523
      %v525 = vsel %vm476, %v510, 0.0
      %526 = vadd.xlane.f32.xlu0 %v525
      %v527 = vpop.xlane.xlu0 %526
      %v528 = vsel %vm476, %v512, 0.0
      %529 = vadd.xlane.f32.xlu0 %v528
      %v530 = vpop.xlane.xlu0 %529
      %v531 = vsel %vm476, %v514, 0.0
      %532 = vadd.xlane.f32.xlu0 %v531
      %v533 = vpop.xlane.xlu0 %532
      %v534 = vsel %vm476, %v516, 0.0
      %535 = vadd.xlane.f32.xlu0 %v534
      %v536 = vpop.xlane.xlu0 %535
      %v537 = vsel %vm476, %v518, 0.0
      %538 = vadd.xlane.f32.xlu0 %v537
      %v539 = vpop.xlane.xlu0 %538
      %v540 = vsel %vm476, %v520, 0.0
      %541 = vadd.xlane.f32.xlu0 %v540
      %v542 = vpop.xlane.xlu0 %541
      %v543 = vsel %vm476, %v522, 0.0
      %544 = vadd.xlane.f32.xlu0 %v543
      %v545 = vpop.xlane.xlu0 %544
      %v546 = vsel %vm476, %v524, 0.0
      %547 = vadd.xlane.f32.xlu0 %v546
      %v548 = vpop.xlane.xlu0 %547
      %v549 = vrcp.pop %v527
      %v550 = vrcp.pop %v530
      %v551 = vrcp.pop %v533
      %v552 = vrcp.pop %v536
      %v553 = vrcp.pop %v539
      %v554 = vrcp.pop %v542
      %v555 = vrcp.pop %v545
      %v556 = vrcp.pop %v548
      %v557 = vmul.f32 %v510, %v549
      %v558 = vmul.f32 %v512, %v550
      %v559 = vmul.f32 %v514, %v551
      %v560 = vmul.f32 %v516, %v552
      %v561 = vmul.f32 %v518, %v553
      %v562 = vmul.f32 %v520, %v554
      %v563 = vmul.f32 %v522, %v555
      %v564 = vmul.f32 %v524, %v556
      %v565 = vld [vmem:[%s4] sm:$0xf]
      %v566 = vld [vmem:[%s4 + $0x4] sm:$0xf]
      %v569 = vunpack.c.l.b16 %v565
      %v570 = vunpack.c.l.b16 %v566
      %v571 = vpack.c.b16 %v570, %v569
      %v573 = vsel %vm386, %v571, 0
      %vm575 = vcmask 1043456
      %v577 = vsel %vm575, %v345, 0
      %579 = vmatprep.subr.bf16.mxu0 0
      %580 = vmatpush1.bf16.msra.mxu0 0
      %581 = vmatprep.subr.bf16.mxu0 0
      %582 = vmatpush1.bf16.msra.mxu0 0
      %583 = vmatprep.subr.bf16.mxu0 0
      %584 = vmatpush1.bf16.msra.mxu0 0
      %585 = vmatprep.subr.bf16.mxu0 0
      %586 = vmatpush1.bf16.msra.mxu0 0
      %587 = vmatprep.subr.bf16.mxu0 0
      %588 = vmatpush1.bf16.msra.mxu0 0
      %589 = vmatprep.subr.bf16.mxu0 0
      %590 = vmatpush1.bf16.msra.mxu0 0
      %591 = vmatprep.subr.bf16.mxu0 0
      %592 = vmatpush1.bf16.msra.mxu0 0
      %593 = vmatprep.subr.bf16.mxu0 0
      %594 = vmatpush1.bf16.msra.mxu0 %v577
      %595 = vmatprep.subr.bf16.mxu0 0
      %596 = vmatpush2.bf16.msra.mxu0 0
      %597 = vmatprep.subr.bf16.mxu0 0
      %598 = vmatpush2.bf16.msra.mxu0 0
      %599 = vmatprep.subr.bf16.mxu0 0
      %600 = vmatpush2.bf16.msra.mxu0 0
      %601 = vmatprep.subr.bf16.mxu0 0
      %602 = vmatpush2.bf16.msra.mxu0 0
      %603 = vmatprep.subr.bf16.mxu0 0
      %604 = vmatpush2.bf16.msra.mxu0 0
      %605 = vmatprep.subr.bf16.mxu0 0
      %606 = vmatpush2.bf16.msra.mxu0 0
      %607 = vmatprep.subr.bf16.mxu0 0
      %608 = vmatpush2.bf16.msra.mxu0 0
      %609 = vmatprep.subr.bf16.mxu0 0
      %610 = vmatpush2.bf16.msra.mxu0 0
      %611 = vmatprep.mubr.bf16.mxu0 0
      %612 = vmatmul.mubr.bf16.gmra.mxu0 %v573
      %v613 = vpop.f32.mrf.mxu0
      %v614 = vadd.f32 0.0, %v613
      %v615 = vpop.f32.mrf.mxu0
      %v616 = vpop.f32.mrf.mxu0
      %v617 = vadd.f32 0.0, %v616
      %v618 = vpop.f32.mrf.mxu0
      %619 = vdwg.mxu0
      %v620 = vpack.c.bf16 %v617, %v614
      %v621 = vpack.c.bf16 %v558, %v557
      %v622 = vpack.c.bf16 %v560, %v559
      %v623 = vpack.c.bf16 %v562, %v561
      %v624 = vpack.c.bf16 %v564, %v563
      %v626 = vsel %vm476, %v620, 0
      %628 = vmatprep.subr.bf16.mxu0 0
      %629 = vmatpush1.bf16.msra.mxu0 0
      %630 = vmatprep.subr.bf16.mxu0 0
      %631 = vmatpush1.bf16.msra.mxu0 0
      %632 = vmatprep.subr.bf16.mxu0 0
      %633 = vmatpush1.bf16.msra.mxu0 0
      %634 = vmatprep.subr.bf16.mxu0 0
      %635 = vmatpush1.bf16.msra.mxu0 0
      %636 = vmatprep.subr.bf16.mxu0 0
      %637 = vmatpush1.bf16.msra.mxu0 %v624
      %638 = vmatprep.subr.bf16.mxu0 0
      %639 = vmatpush1.bf16.msra.mxu0 %v623
      %640 = vmatprep.subr.bf16.mxu0 0
      %641 = vmatpush1.bf16.msra.mxu0 %v622
      %642 = vmatprep.subr.bf16.mxu0 0
      %643 = vmatpush1.bf16.msra.mxu0 %v621
      %644 = vmatprep.subr.bf16.mxu0 0
      %645 = vmatpush2.bf16.msra.mxu0 0
      %646 = vmatprep.subr.bf16.mxu0 0
      %647 = vmatpush2.bf16.msra.mxu0 0
      %648 = vmatprep.subr.bf16.mxu0 0
      %649 = vmatpush2.bf16.msra.mxu0 0
      %650 = vmatprep.subr.bf16.mxu0 0
      %651 = vmatpush2.bf16.msra.mxu0 0
      %652 = vmatprep.subr.bf16.mxu0 0
      %653 = vmatpush2.bf16.msra.mxu0 0
      %654 = vmatprep.subr.bf16.mxu0 0
      %655 = vmatpush2.bf16.msra.mxu0 0
      %656 = vmatprep.subr.bf16.mxu0 0
      %657 = vmatpush2.bf16.msra.mxu0 0
      %658 = vmatprep.subr.bf16.mxu0 0
      %659 = vmatpush2.bf16.msra.mxu0 0
      %660 = vmatprep.mubr.bf16.mxu0 0
      %661 = vmatmul.mubr.bf16.gmra.mxu0 %v626
      %v662 = vpop.f32.mrf.mxu0
      %v663 = vadd.f32 0.0, %v662
      %v664 = vpop.f32.mrf.mxu0
      %v665 = vpop.f32.mrf.mxu0
      %v666 = vadd.f32 0.0, %v665
      %v667 = vpop.f32.mrf.mxu0
      %668 = vdwg.mxu0
      %v669 = vadd.f32 %v327, %v663
      %v670 = vadd.f32 %v328, %v666
      %s671 = scalar_lea.vmem %s291, 32
      %v672 = vld [vmem:[%s671] sm:$0xf]
      %v673 = vld [vmem:[%s671 + $0x4] sm:$0xf]
      %v674 = vld [vmem:[%s671 + $0x8] sm:$0xf]
      %v675 = vld [vmem:[%s671 + $0xc] sm:$0xf]
      %v676 = vld [vmem:[%s671 + $0x10] sm:$0xf]
      %v677 = vld [vmem:[%s671 + $0x14] sm:$0xf]
      %v678 = vld [vmem:[%s671 + $0x18] sm:$0xf]
      %v679 = vld [vmem:[%s671 + $0x1c] sm:$0xf]
      %s680 = scalar_lea.vmem %s296, 32
      %v681 = vld [vmem:[%s680] sm:$0xf]
      %v682 = vld [vmem:[%s680 + $0x4] sm:$0xf]
      %v683 = vld [vmem:[%s680 + $0x8] sm:$0xf]
      %v684 = vld [vmem:[%s680 + $0xc] sm:$0xf]
      %v685 = vld [vmem:[%s680 + $0x10] sm:$0xf]
      %v686 = vld [vmem:[%s680 + $0x14] sm:$0xf]
      %v687 = vld [vmem:[%s680 + $0x18] sm:$0xf]
      %v688 = vld [vmem:[%s680 + $0x1c] sm:$0xf]
      %s689 = scalar_lea.vmem %s301, 4
      %v690 = vld [vmem:[%s689] sm:$0xf]
      %v699 = vunpack.c.l.b16 %v681
      %v700 = vunpack.c.l.b16 %v682
      %v701 = vunpack.c.l.b16 %v683
      %v702 = vunpack.c.l.b16 %v684
      %v703 = vunpack.c.l.b16 %v685
      %v704 = vunpack.c.l.b16 %v686
      %v705 = vunpack.c.l.b16 %v687
      %v706 = vunpack.c.l.b16 %v688
      %v707 = vpack.c.b16 %v700, %v699
      %v708 = vpack.c.b16 %v702, %v701
      %v709 = vpack.c.b16 %v704, %v703
      %v710 = vpack.c.b16 %v706, %v705
      %v719 = vunpack.c.l.b16 %v672
      %v720 = vunpack.c.l.b16 %v673
      %v721 = vunpack.c.l.b16 %v674
      %v722 = vunpack.c.l.b16 %v675
      %v723 = vunpack.c.l.b16 %v676
      %v724 = vunpack.c.l.b16 %v677
      %v725 = vunpack.c.l.b16 %v678
      %v726 = vunpack.c.l.b16 %v679
      %v727 = vpack.c.b16 %v720, %v719
      %v728 = vpack.c.b16 %v722, %v721
      %v729 = vpack.c.b16 %v724, %v723
      %v730 = vpack.c.b16 %v726, %v725
      %v732 = vsel %vm386, %v707, 0
      %v735 = vsel %vm386, %v708, 0
      %v738 = vsel %vm386, %v709, 0
      %v741 = vsel %vm386, %v710, 0
      %v744 = vsel %vm386, %v727, 0
      %v747 = vsel %vm386, %v728, 0
      %v750 = vsel %vm386, %v729, 0
      %v753 = vsel %vm386, %v730, 0
      %755 = vmatprep.subr.bf16.mxu0 0
      %756 = vmatpush1.bf16.xpose.msra.mxu0 0
      %757 = vmatprep.subr.bf16.mxu0 0
      %758 = vmatpush1.bf16.xpose.msra.mxu0 0
      %759 = vmatprep.subr.bf16.mxu0 0
      %760 = vmatpush1.bf16.xpose.msra.mxu0 0
      %761 = vmatprep.subr.bf16.mxu0 0
      %762 = vmatpush1.bf16.xpose.msra.mxu0 0
      %763 = vmatprep.subr.bf16.mxu0 0
      %764 = vmatpush1.bf16.xpose.msra.mxu0 %v753
      %765 = vmatprep.subr.bf16.mxu0 0
      %766 = vmatpush1.bf16.xpose.msra.mxu0 %v750
      %767 = vmatprep.subr.bf16.mxu0 0
      %768 = vmatpush1.bf16.xpose.msra.mxu0 %v747
      %769 = vmatprep.subr.bf16.mxu0 0
      %770 = vmatpush1.bf16.xpose.msra.mxu0 %v744
      %771 = vmatprep.subr.bf16.mxu0 0
      %772 = vmatpush2.bf16.xpose.msra.mxu0 0
      %773 = vmatprep.subr.bf16.mxu0 0
      %774 = vmatpush2.bf16.xpose.msra.mxu0 0
      %775 = vmatprep.subr.bf16.mxu0 0
      %776 = vmatpush2.bf16.xpose.msra.mxu0 0
      %777 = vmatprep.subr.bf16.mxu0 0
      %778 = vmatpush2.bf16.xpose.msra.mxu0 0
      %779 = vmatprep.subr.bf16.mxu0 0
      %780 = vmatpush2.bf16.xpose.msra.mxu0 0
      %781 = vmatprep.subr.bf16.mxu0 0
      %782 = vmatpush2.bf16.xpose.msra.mxu0 0
      %783 = vmatprep.subr.bf16.mxu0 0
      %784 = vmatpush2.bf16.xpose.msra.mxu0 0
      %785 = vmatprep.subr.bf16.mxu0 0
      %786 = vmatpush2.bf16.xpose.msra.mxu0 0
      %787 = vmatprep.mubr.bf16.mxu0 0
      %788 = vmatmul.mubr.bf16.gmra.mxu0 %v732
      %v789 = vpop.f32.mrf.mxu0
      %v790 = vadd.f32 0.0, %v789
      %v791 = vpop.f32.mrf.mxu0
      %v792 = vpop.f32.mrf.mxu0
      %v793 = vadd.f32 0.0, %v792
      %v794 = vpop.f32.mrf.mxu0
      %795 = vmatprep.mubr.bf16.mxu0 0
      %796 = vmatmul.mubr.bf16.gmra.mxu0 %v735
      %v797 = vpop.f32.mrf.mxu0
      %v798 = vadd.f32 0.0, %v797
      %v799 = vpop.f32.mrf.mxu0
      %v800 = vpop.f32.mrf.mxu0
      %v801 = vadd.f32 0.0, %v800
      %v802 = vpop.f32.mrf.mxu0
      %803 = vmatprep.mubr.bf16.mxu0 0
      %804 = vmatmul.mubr.bf16.gmra.mxu0 %v738
      %v805 = vpop.f32.mrf.mxu0
      %v806 = vadd.f32 0.0, %v805
      %v807 = vpop.f32.mrf.mxu0
      %v808 = vpop.f32.mrf.mxu0
      %v809 = vadd.f32 0.0, %v808
      %v810 = vpop.f32.mrf.mxu0
      %811 = vmatprep.mubr.bf16.mxu0 0
      %812 = vmatmul.mubr.bf16.gmra.mxu0 %v741
      %v813 = vpop.f32.mrf.mxu0
      %v814 = vadd.f32 0.0, %v813
      %v815 = vpop.f32.mrf.mxu0
      %v816 = vpop.f32.mrf.mxu0
      %v817 = vadd.f32 0.0, %v816
      %v818 = vpop.f32.mrf.mxu0
      %819 = vdwg.mxu0
      %v820 = vsel %vm476, %v790, -inf
      %821 = vmax.xlane.f32.xlu0 %v820
      %v822 = vpop.xlane.xlu0 %821
      %v823 = vsel %vm476, %v793, -inf
      %824 = vmax.xlane.f32.xlu0 %v823
      %v825 = vpop.xlane.xlu0 %824
      %v826 = vsel %vm476, %v798, -inf
      %827 = vmax.xlane.f32.xlu0 %v826
      %v828 = vpop.xlane.xlu0 %827
      %v829 = vsel %vm476, %v801, -inf
      %830 = vmax.xlane.f32.xlu0 %v829
      %v831 = vpop.xlane.xlu0 %830
      %v832 = vsel %vm476, %v806, -inf
      %833 = vmax.xlane.f32.xlu0 %v832
      %v834 = vpop.xlane.xlu0 %833
      %v835 = vsel %vm476, %v809, -inf
      %836 = vmax.xlane.f32.xlu0 %v835
      %v837 = vpop.xlane.xlu0 %836
      %v838 = vsel %vm476, %v814, -inf
      %839 = vmax.xlane.f32.xlu0 %v838
      %v840 = vpop.xlane.xlu0 %839
      %v841 = vsel %vm476, %v817, -inf
      %842 = vmax.xlane.f32.xlu0 %v841
      %v843 = vpop.xlane.xlu0 %842
      %v844 = vsub.f32 %v790, %v822
      %v845 = vsub.f32 %v793, %v825
      %v846 = vsub.f32 %v798, %v828
      %v847 = vsub.f32 %v801, %v831
      %v848 = vsub.f32 %v806, %v834
      %v849 = vsub.f32 %v809, %v837
      %v850 = vsub.f32 %v814, %v840
      %v851 = vsub.f32 %v817, %v843
      %v852 = vmul.f32 %v844, 1.442695
      %v853 = vpow.pop %v852
      %v854 = vmul.f32 %v845, 1.442695
      %v855 = vpow.pop %v854
      %v856 = vmul.f32 %v846, 1.442695
      %v857 = vpow.pop %v856
      %v858 = vmul.f32 %v847, 1.442695
      %v859 = vpow.pop %v858
      %v860 = vmul.f32 %v848, 1.442695
      %v861 = vpow.pop %v860
      %v862 = vmul.f32 %v849, 1.442695
      %v863 = vpow.pop %v862
      %v864 = vmul.f32 %v850, 1.442695
      %v865 = vpow.pop %v864
      %v866 = vmul.f32 %v851, 1.442695
      %v867 = vpow.pop %v866
      %v868 = vsel %vm476, %v853, 0.0
      %869 = vadd.xlane.f32.xlu0 %v868
      %v870 = vpop.xlane.xlu0 %869
      %v871 = vsel %vm476, %v855, 0.0
      %872 = vadd.xlane.f32.xlu0 %v871
      %v873 = vpop.xlane.xlu0 %872
      %v874 = vsel %vm476, %v857, 0.0
      %875 = vadd.xlane.f32.xlu0 %v874
      %v876 = vpop.xlane.xlu0 %875
      %v877 = vsel %vm476, %v859, 0.0
      %878 = vadd.xlane.f32.xlu0 %v877
      %v879 = vpop.xlane.xlu0 %878
      %v880 = vsel %vm476, %v861, 0.0
      %881 = vadd.xlane.f32.xlu0 %v880
      %v882 = vpop.xlane.xlu0 %881
      %v883 = vsel %vm476, %v863, 0.0
      %884 = vadd.xlane.f32.xlu0 %v883
      %v885 = vpop.xlane.xlu0 %884
      %v886 = vsel %vm476, %v865, 0.0
      %887 = vadd.xlane.f32.xlu0 %v886
      %v888 = vpop.xlane.xlu0 %887
      %v889 = vsel %vm476, %v867, 0.0
      %890 = vadd.xlane.f32.xlu0 %v889
      %v891 = vpop.xlane.xlu0 %890
      %v892 = vrcp.pop %v870
      %v893 = vrcp.pop %v873
      %v894 = vrcp.pop %v876
      %v895 = vrcp.pop %v879
      %v896 = vrcp.pop %v882
      %v897 = vrcp.pop %v885
      %v898 = vrcp.pop %v888
      %v899 = vrcp.pop %v891
      %v900 = vmul.f32 %v853, %v892
      %v901 = vmul.f32 %v855, %v893
      %v902 = vmul.f32 %v857, %v894
      %v903 = vmul.f32 %v859, %v895
      %v904 = vmul.f32 %v861, %v896
      %v905 = vmul.f32 %v863, %v897
      %v906 = vmul.f32 %v865, %v898
      %v907 = vmul.f32 %v867, %v899
      %s908 = scalar_lea.vmem %s4, 8
      %v909 = vld [vmem:[%s908] sm:$0xf]
      %v910 = vld [vmem:[%s908 + $0x4] sm:$0xf]
      %v913 = vunpack.c.l.b16 %v909
      %v914 = vunpack.c.l.b16 %v910
      %v915 = vpack.c.b16 %v914, %v913
      %v917 = vsel %vm386, %v915, 0
      %v920 = vsel %vm575, %v690, 0
      %922 = vmatprep.subr.bf16.mxu0 0
      %923 = vmatpush1.bf16.msra.mxu0 0
      %924 = vmatprep.subr.bf16.mxu0 0
      %925 = vmatpush1.bf16.msra.mxu0 0
      %926 = vmatprep.subr.bf16.mxu0 0
      %927 = vmatpush1.bf16.msra.mxu0 0
      %928 = vmatprep.subr.bf16.mxu0 0
      %929 = vmatpush1.bf16.msra.mxu0 0
      %930 = vmatprep.subr.bf16.mxu0 0
      %931 = vmatpush1.bf16.msra.mxu0 0
      %932 = vmatprep.subr.bf16.mxu0 0
      %933 = vmatpush1.bf16.msra.mxu0 0
      %934 = vmatprep.subr.bf16.mxu0 0
      %935 = vmatpush1.bf16.msra.mxu0 0
      %936 = vmatprep.subr.bf16.mxu0 0
      %937 = vmatpush1.bf16.msra.mxu0 %v920
      %938 = vmatprep.subr.bf16.mxu0 0
      %939 = vmatpush2.bf16.msra.mxu0 0
      %940 = vmatprep.subr.bf16.mxu0 0
      %941 = vmatpush2.bf16.msra.mxu0 0
      %942 = vmatprep.subr.bf16.mxu0 0
      %943 = vmatpush2.bf16.msra.mxu0 0
      %944 = vmatprep.subr.bf16.mxu0 0
      %945 = vmatpush2.bf16.msra.mxu0 0
      %946 = vmatprep.subr.bf16.mxu0 0
      %947 = vmatpush2.bf16.msra.mxu0 0
      %948 = vmatprep.subr.bf16.mxu0 0
      %949 = vmatpush2.bf16.msra.mxu0 0
      %950 = vmatprep.subr.bf16.mxu0 0
      %951 = vmatpush2.bf16.msra.mxu0 0
      %952 = vmatprep.subr.bf16.mxu0 0
      %953 = vmatpush2.bf16.msra.mxu0 0
      %954 = vmatprep.mubr.bf16.mxu0 0
      %955 = vmatmul.mubr.bf16.gmra.mxu0 %v917
      %v956 = vpop.f32.mrf.mxu0
      %v957 = vadd.f32 0.0, %v956
      %v958 = vpop.f32.mrf.mxu0
      %v959 = vpop.f32.mrf.mxu0
      %v960 = vadd.f32 0.0, %v959
      %v961 = vpop.f32.mrf.mxu0
      %962 = vdwg.mxu0
      %v963 = vpack.c.bf16 %v960, %v957
      %v964 = vpack.c.bf16 %v901, %v900
      %v965 = vpack.c.bf16 %v903, %v902
      %v966 = vpack.c.bf16 %v905, %v904
      %v967 = vpack.c.bf16 %v907, %v906
      %v969 = vsel %vm476, %v963, 0
      %971 = vmatprep.subr.bf16.mxu0 0
      %972 = vmatpush1.bf16.msra.mxu0 0
      %973 = vmatprep.subr.bf16.mxu0 0
      %974 = vmatpush1.bf16.msra.mxu0 0
      %975 = vmatprep.subr.bf16.mxu0 0
      %976 = vmatpush1.bf16.msra.mxu0 0
      %977 = vmatprep.subr.bf16.mxu0 0
      %978 = vmatpush1.bf16.msra.mxu0 0
      %979 = vmatprep.subr.bf16.mxu0 0
      %980 = vmatpush1.bf16.msra.mxu0 %v967
      %981 = vmatprep.subr.bf16.mxu0 0
      %982 = vmatpush1.bf16.msra.mxu0 %v966
      %983 = vmatprep.subr.bf16.mxu0 0
      %984 = vmatpush1.bf16.msra.mxu0 %v965
      %985 = vmatprep.subr.bf16.mxu0 0
      %986 = vmatpush1.bf16.msra.mxu0 %v964
      %987 = vmatprep.subr.bf16.mxu0 0
      %988 = vmatpush2.bf16.msra.mxu0 0
      %989 = vmatprep.subr.bf16.mxu0 0
      %990 = vmatpush2.bf16.msra.mxu0 0
      %991 = vmatprep.subr.bf16.mxu0 0
      %992 = vmatpush2.bf16.msra.mxu0 0
      %993 = vmatprep.subr.bf16.mxu0 0
      %994 = vmatpush2.bf16.msra.mxu0 0
      %995 = vmatprep.subr.bf16.mxu0 0
      %996 = vmatpush2.bf16.msra.mxu0 0
      %997 = vmatprep.subr.bf16.mxu0 0
      %998 = vmatpush2.bf16.msra.mxu0 0
      %999 = vmatprep.subr.bf16.mxu0 0
      %1000 = vmatpush2.bf16.msra.mxu0 0
      %1001 = vmatprep.subr.bf16.mxu0 0
      %1002 = vmatpush2.bf16.msra.mxu0 0
      %1003 = vmatprep.mubr.bf16.mxu0 0
      %1004 = vmatmul.mubr.bf16.gmra.mxu0 %v969
      %v1005 = vpop.f32.mrf.mxu0
      %v1006 = vadd.f32 0.0, %v1005
      %v1007 = vpop.f32.mrf.mxu0
      %v1008 = vpop.f32.mrf.mxu0
      %v1009 = vadd.f32 0.0, %v1008
      %v1010 = vpop.f32.mrf.mxu0
      %1011 = vdwg.mxu0
      %v1012 = vadd.f32 %v669, %v1006
      %v1013 = vadd.f32 %v670, %v1009
      %s1014 = scalar_lea.vmem %s291, 64
      %v1015 = vld [vmem:[%s1014] sm:$0xf]
      %v1016 = vld [vmem:[%s1014 + $0x4] sm:$0xf]
      %v1017 = vld [vmem:[%s1014 + $0x8] sm:$0xf]
      %v1018 = vld [vmem:[%s1014 + $0xc] sm:$0xf]
      %v1019 = vld [vmem:[%s1014 + $0x10] sm:$0xf]
      %v1020 = vld [vmem:[%s1014 + $0x14] sm:$0xf]
      %v1021 = vld [vmem:[%s1014 + $0x18] sm:$0xf]
      %v1022 = vld [vmem:[%s1014 + $0x1c] sm:$0xf]
      %s1023 = scalar_lea.vmem %s296, 64
      %v1024 = vld [vmem:[%s1023] sm:$0xf]
      %v1025 = vld [vmem:[%s1023 + $0x4] sm:$0xf]
      %v1026 = vld [vmem:[%s1023 + $0x8] sm:$0xf]
      %v1027 = vld [vmem:[%s1023 + $0xc] sm:$0xf]
      %v1028 = vld [vmem:[%s1023 + $0x10] sm:$0xf]
      %v1029 = vld [vmem:[%s1023 + $0x14] sm:$0xf]
      %v1030 = vld [vmem:[%s1023 + $0x18] sm:$0xf]
      %v1031 = vld [vmem:[%s1023 + $0x1c] sm:$0xf]
      %s1032 = scalar_lea.vmem %s301, 8
      %v1033 = vld [vmem:[%s1032] sm:$0xf]
      %v1042 = vunpack.c.l.b16 %v1024
      %v1043 = vunpack.c.l.b16 %v1025
      %v1044 = vunpack.c.l.b16 %v1026
      %v1045 = vunpack.c.l.b16 %v1027
      %v1046 = vunpack.c.l.b16 %v1028
      %v1047 = vunpack.c.l.b16 %v1029
      %v1048 = vunpack.c.l.b16 %v1030
      %v1049 = vunpack.c.l.b16 %v1031
      %v1050 = vpack.c.b16 %v1043, %v1042
      %v1051 = vpack.c.b16 %v1045, %v1044
      %v1052 = vpack.c.b16 %v1047, %v1046
      %v1053 = vpack.c.b16 %v1049, %v1048
      %v1062 = vunpack.c.l.b16 %v1015
      %v1063 = vunpack.c.l.b16 %v1016
      %v1064 = vunpack.c.l.b16 %v1017
      %v1065 = vunpack.c.l.b16 %v1018
      %v1066 = vunpack.c.l.b16 %v1019
      %v1067 = vunpack.c.l.b16 %v1020
      %v1068 = vunpack.c.l.b16 %v1021
      %v1069 = vunpack.c.l.b16 %v1022
      %v1070 = vpack.c.b16 %v1063, %v1062
      %v1071 = vpack.c.b16 %v1065, %v1064
      %v1072 = vpack.c.b16 %v1067, %v1066
      %v1073 = vpack.c.b16 %v1069, %v1068
      %v1075 = vsel %vm386, %v1050, 0
      %v1078 = vsel %vm386, %v1051, 0
      %v1081 = vsel %vm386, %v1052, 0
      %v1084 = vsel %vm386, %v1053, 0
      %v1087 = vsel %vm386, %v1070, 0
      %v1090 = vsel %vm386, %v1071, 0
      %v1093 = vsel %vm386, %v1072, 0
      %v1096 = vsel %vm386, %v1073, 0
      %1098 = vmatprep.subr.bf16.mxu0 0
      %1099 = vmatpush1.bf16.xpose.msra.mxu0 0
      %1100 = vmatprep.subr.bf16.mxu0 0
      %1101 = vmatpush1.bf16.xpose.msra.mxu0 0
      %1102 = vmatprep.subr.bf16.mxu0 0
      %1103 = vmatpush1.bf16.xpose.msra.mxu0 0
      %1104 = vmatprep.subr.bf16.mxu0 0
      %1105 = vmatpush1.bf16.xpose.msra.mxu0 0
      %1106 = vmatprep.subr.bf16.mxu0 0
      %1107 = vmatpush1.bf16.xpose.msra.mxu0 %v1096
      %1108 = vmatprep.subr.bf16.mxu0 0
      %1109 = vmatpush1.bf16.xpose.msra.mxu0 %v1093
      %1110 = vmatprep.subr.bf16.mxu0 0
      %1111 = vmatpush1.bf16.xpose.msra.mxu0 %v1090
      %1112 = vmatprep.subr.bf16.mxu0 0
      %1113 = vmatpush1.bf16.xpose.msra.mxu0 %v1087
      %1114 = vmatprep.subr.bf16.mxu0 0
      %1115 = vmatpush2.bf16.xpose.msra.mxu0 0
      %1116 = vmatprep.subr.bf16.mxu0 0
      %1117 = vmatpush2.bf16.xpose.msra.mxu0 0
      %1118 = vmatprep.subr.bf16.mxu0 0
      %1119 = vmatpush2.bf16.xpose.msra.mxu0 0
      %1120 = vmatprep.subr.bf16.mxu0 0
      %1121 = vmatpush2.bf16.xpose.msra.mxu0 0
      %1122 = vmatprep.subr.bf16.mxu0 0
      %1123 = vmatpush2.bf16.xpose.msra.mxu0 0
      %1124 = vmatprep.subr.bf16.mxu0 0
      %1125 = vmatpush2.bf16.xpose.msra.mxu0 0
      %1126 = vmatprep.subr.bf16.mxu0 0
      %1127 = vmatpush2.bf16.xpose.msra.mxu0 0
      %1128 = vmatprep.subr.bf16.mxu0 0
      %1129 = vmatpush2.bf16.xpose.msra.mxu0 0
      %1130 = vmatprep.mubr.bf16.mxu0 0
      %1131 = vmatmul.mubr.bf16.gmra.mxu0 %v1075
      %v1132 = vpop.f32.mrf.mxu0
      %v1133 = vadd.f32 0.0, %v1132
      %v1134 = vpop.f32.mrf.mxu0
      %v1135 = vpop.f32.mrf.mxu0
      %v1136 = vadd.f32 0.0, %v1135
      %v1137 = vpop.f32.mrf.mxu0
      %1138 = vmatprep.mubr.bf16.mxu0 0
      %1139 = vmatmul.mubr.bf16.gmra.mxu0 %v1078
      %v1140 = vpop.f32.mrf.mxu0
      %v1141 = vadd.f32 0.0, %v1140
      %v1142 = vpop.f32.mrf.mxu0
      %v1143 = vpop.f32.mrf.mxu0
      %v1144 = vadd.f32 0.0, %v1143
      %v1145 = vpop.f32.mrf.mxu0
      %1146 = vmatprep.mubr.bf16.mxu0 0
      %1147 = vmatmul.mubr.bf16.gmra.mxu0 %v1081
      %v1148 = vpop.f32.mrf.mxu0
      %v1149 = vadd.f32 0.0, %v1148
      %v1150 = vpop.f32.mrf.mxu0
      %v1151 = vpop.f32.mrf.mxu0
      %v1152 = vadd.f32 0.0, %v1151
      %v1153 = vpop.f32.mrf.mxu0
      %1154 = vmatprep.mubr.bf16.mxu0 0
      %1155 = vmatmul.mubr.bf16.gmra.mxu0 %v1084
      %v1156 = vpop.f32.mrf.mxu0
      %v1157 = vadd.f32 0.0, %v1156
      %v1158 = vpop.f32.mrf.mxu0
      %v1159 = vpop.f32.mrf.mxu0
      %v1160 = vadd.f32 0.0, %v1159
      %v1161 = vpop.f32.mrf.mxu0
      %1162 = vdwg.mxu0
      %v1163 = vsel %vm476, %v1133, -inf
      %1164 = vmax.xlane.f32.xlu0 %v1163
      %v1165 = vpop.xlane.xlu0 %1164
      %v1166 = vsel %vm476, %v1136, -inf
      %1167 = vmax.xlane.f32.xlu0 %v1166
      %v1168 = vpop.xlane.xlu0 %1167
      %v1169 = vsel %vm476, %v1141, -inf
      %1170 = vmax.xlane.f32.xlu0 %v1169
      %v1171 = vpop.xlane.xlu0 %1170
      %v1172 = vsel %vm476, %v1144, -inf
      %1173 = vmax.xlane.f32.xlu0 %v1172
      %v1174 = vpop.xlane.xlu0 %1173
      %v1175 = vsel %vm476, %v1149, -inf
      %1176 = vmax.xlane.f32.xlu0 %v1175
      %v1177 = vpop.xlane.xlu0 %1176
      %v1178 = vsel %vm476, %v1152, -inf
      %1179 = vmax.xlane.f32.xlu0 %v1178
      %v1180 = vpop.xlane.xlu0 %1179
      %v1181 = vsel %vm476, %v1157, -inf
      %1182 = vmax.xlane.f32.xlu0 %v1181
      %v1183 = vpop.xlane.xlu0 %1182
      %v1184 = vsel %vm476, %v1160, -inf
      %1185 = vmax.xlane.f32.xlu0 %v1184
      %v1186 = vpop.xlane.xlu0 %1185
      %v1187 = vsub.f32 %v1133, %v1165
      %v1188 = vsub.f32 %v1136, %v1168
      %v1189 = vsub.f32 %v1141, %v1171
      %v1190 = vsub.f32 %v1144, %v1174
      %v1191 = vsub.f32 %v1149, %v1177
      %v1192 = vsub.f32 %v1152, %v1180
      %v1193 = vsub.f32 %v1157, %v1183
      %v1194 = vsub.f32 %v1160, %v1186
      %v1195 = vmul.f32 %v1187, 1.442695
      %v1196 = vpow.pop %v1195
      %v1197 = vmul.f32 %v1188, 1.442695
      %v1198 = vpow.pop %v1197
      %v1199 = vmul.f32 %v1189, 1.442695
      %v1200 = vpow.pop %v1199
      %v1201 = vmul.f32 %v1190, 1.442695
      %v1202 = vpow.pop %v1201
      %v1203 = vmul.f32 %v1191, 1.442695
      %v1204 = vpow.pop %v1203
      %v1205 = vmul.f32 %v1192, 1.442695
      %v1206 = vpow.pop %v1205
      %v1207 = vmul.f32 %v1193, 1.442695
      %v1208 = vpow.pop %v1207
      %v1209 = vmul.f32 %v1194, 1.442695
      %v1210 = vpow.pop %v1209
      %v1211 = vsel %vm476, %v1196, 0.0
      %1212 = vadd.xlane.f32.xlu0 %v1211
      %v1213 = vpop.xlane.xlu0 %1212
      %v1214 = vsel %vm476, %v1198, 0.0
      %1215 = vadd.xlane.f32.xlu0 %v1214
      %v1216 = vpop.xlane.xlu0 %1215
      %v1217 = vsel %vm476, %v1200, 0.0
      %1218 = vadd.xlane.f32.xlu0 %v1217
      %v1219 = vpop.xlane.xlu0 %1218
      %v1220 = vsel %vm476, %v1202, 0.0
      %1221 = vadd.xlane.f32.xlu0 %v1220
      %v1222 = vpop.xlane.xlu0 %1221
      %v1223 = vsel %vm476, %v1204, 0.0
      %1224 = vadd.xlane.f32.xlu0 %v1223
      %v1225 = vpop.xlane.xlu0 %1224
      %v1226 = vsel %vm476, %v1206, 0.0
      %1227 = vadd.xlane.f32.xlu0 %v1226
      %v1228 = vpop.xlane.xlu0 %1227
      %v1229 = vsel %vm476, %v1208, 0.0
      %1230 = vadd.xlane.f32.xlu0 %v1229
      %v1231 = vpop.xlane.xlu0 %1230
      %v1232 = vsel %vm476, %v1210, 0.0
      %1233 = vadd.xlane.f32.xlu0 %v1232
      %v1234 = vpop.xlane.xlu0 %1233
      %v1235 = vrcp.pop %v1213
      %v1236 = vrcp.pop %v1216
      %v1237 = vrcp.pop %v1219
      %v1238 = vrcp.pop %v1222
      %v1239 = vrcp.pop %v1225
      %v1240 = vrcp.pop %v1228
      %v1241 = vrcp.pop %v1231
      %v1242 = vrcp.pop %v1234
      %v1243 = vmul.f32 %v1196, %v1235
      %v1244 = vmul.f32 %v1198, %v1236
      %v1245 = vmul.f32 %v1200, %v1237
      %v1246 = vmul.f32 %v1202, %v1238
      %v1247 = vmul.f32 %v1204, %v1239
      %v1248 = vmul.f32 %v1206, %v1240
      %v1249 = vmul.f32 %v1208, %v1241
      %v1250 = vmul.f32 %v1210, %v1242
      %s1251 = scalar_lea.vmem %s4, 16
      %v1252 = vld [vmem:[%s1251] sm:$0xf]
      %v1253 = vld [vmem:[%s1251 + $0x4] sm:$0xf]
      %v1256 = vunpack.c.l.b16 %v1252
      %v1257 = vunpack.c.l.b16 %v1253
      %v1258 = vpack.c.b16 %v1257, %v1256
      %v1260 = vsel %vm386, %v1258, 0
      %v1263 = vsel %vm575, %v1033, 0
      %1265 = vmatprep.subr.bf16.mxu0 0
      %1266 = vmatpush1.bf16.msra.mxu0 0
      %1267 = vmatprep.subr.bf16.mxu0 0
      %1268 = vmatpush1.bf16.msra.mxu0 0
      %1269 = vmatprep.subr.bf16.mxu0 0
      %1270 = vmatpush1.bf16.msra.mxu0 0
      %1271 = vmatprep.subr.bf16.mxu0 0
      %1272 = vmatpush1.bf16.msra.mxu0 0
      %1273 = vmatprep.subr.bf16.mxu0 0
      %1274 = vmatpush1.bf16.msra.mxu0 0
      %1275 = vmatprep.subr.bf16.mxu0 0
      %1276 = vmatpush1.bf16.msra.mxu0 0
      %1277 = vmatprep.subr.bf16.mxu0 0
      %1278 = vmatpush1.bf16.msra.mxu0 0
      %1279 = vmatprep.subr.bf16.mxu0 0
      %1280 = vmatpush1.bf16.msra.mxu0 %v1263
      %1281 = vmatprep.subr.bf16.mxu0 0
      %1282 = vmatpush2.bf16.msra.mxu0 0
      %1283 = vmatprep.subr.bf16.mxu0 0
      %1284 = vmatpush2.bf16.msra.mxu0 0
      %1285 = vmatprep.subr.bf16.mxu0 0
      %1286 = vmatpush2.bf16.msra.mxu0 0
      %1287 = vmatprep.subr.bf16.mxu0 0
      %1288 = vmatpush2.bf16.msra.mxu0 0
      %1289 = vmatprep.subr.bf16.mxu0 0
      %1290 = vmatpush2.bf16.msra.mxu0 0
      %1291 = vmatprep.subr.bf16.mxu0 0
      %1292 = vmatpush2.bf16.msra.mxu0 0
      %1293 = vmatprep.subr.bf16.mxu0 0
      %1294 = vmatpush2.bf16.msra.mxu0 0
      %1295 = vmatprep.subr.bf16.mxu0 0
      %1296 = vmatpush2.bf16.msra.mxu0 0
      %1297 = vmatprep.mubr.bf16.mxu0 0
      %1298 = vmatmul.mubr.bf16.gmra.mxu0 %v1260
      %v1299 = vpop.f32.mrf.mxu0
      %v1300 = vadd.f32 0.0, %v1299
      %v1301 = vpop.f32.mrf.mxu0
      %v1302 = vpop.f32.mrf.mxu0
      %v1303 = vadd.f32 0.0, %v1302
      %v1304 = vpop.f32.mrf.mxu0
      %1305 = vdwg.mxu0
      %v1306 = vpack.c.bf16 %v1303, %v1300
      %v1307 = vpack.c.bf16 %v1244, %v1243
      %v1308 = vpack.c.bf16 %v1246, %v1245
      %v1309 = vpack.c.bf16 %v1248, %v1247
      %v1310 = vpack.c.bf16 %v1250, %v1249
      %v1312 = vsel %vm476, %v1306, 0
      %1314 = vmatprep.subr.bf16.mxu0 0
      %1315 = vmatpush1.bf16.msra.mxu0 0
      %1316 = vmatprep.subr.bf16.mxu0 0
      %1317 = vmatpush1.bf16.msra.mxu0 0
      %1318 = vmatprep.subr.bf16.mxu0 0
      %1319 = vmatpush1.bf16.msra.mxu0 0
      %1320 = vmatprep.subr.bf16.mxu0 0
      %1321 = vmatpush1.bf16.msra.mxu0 0
      %1322 = vmatprep.subr.bf16.mxu0 0
      %1323 = vmatpush1.bf16.msra.mxu0 %v1310
      %1324 = vmatprep.subr.bf16.mxu0 0
      %1325 = vmatpush1.bf16.msra.mxu0 %v1309
      %1326 = vmatprep.subr.bf16.mxu0 0
      %1327 = vmatpush1.bf16.msra.mxu0 %v1308
      %1328 = vmatprep.subr.bf16.mxu0 0
      %1329 = vmatpush1.bf16.msra.mxu0 %v1307
      %1330 = vmatprep.subr.bf16.mxu0 0
      %1331 = vmatpush2.bf16.msra.mxu0 0
      %1332 = vmatprep.subr.bf16.mxu0 0
      %1333 = vmatpush2.bf16.msra.mxu0 0
      %1334 = vmatprep.subr.bf16.mxu0 0
      %1335 = vmatpush2.bf16.msra.mxu0 0
      %1336 = vmatprep.subr.bf16.mxu0 0
      %1337 = vmatpush2.bf16.msra.mxu0 0
      %1338 = vmatprep.subr.bf16.mxu0 0
      %1339 = vmatpush2.bf16.msra.mxu0 0
      %1340 = vmatprep.subr.bf16.mxu0 0
      %1341 = vmatpush2.bf16.msra.mxu0 0
      %1342 = vmatprep.subr.bf16.mxu0 0
      %1343 = vmatpush2.bf16.msra.mxu0 0
      %1344 = vmatprep.subr.bf16.mxu0 0
      %1345 = vmatpush2.bf16.msra.mxu0 0
      %1346 = vmatprep.mubr.bf16.mxu0 0
      %1347 = vmatmul.mubr.bf16.gmra.mxu0 %v1312
      %v1348 = vpop.f32.mrf.mxu0
      %v1349 = vadd.f32 0.0, %v1348
      %v1350 = vpop.f32.mrf.mxu0
      %v1351 = vpop.f32.mrf.mxu0
      %v1352 = vadd.f32 0.0, %v1351
      %v1353 = vpop.f32.mrf.mxu0
      %1354 = vdwg.mxu0
      %v1355 = vadd.f32 %v1012, %v1349
      %v1356 = vadd.f32 %v1013, %v1352
      %s1357 = scalar_lea.vmem %s291, 96
      %v1358 = vld [vmem:[%s1357] sm:$0xf]
      %v1359 = vld [vmem:[%s1357 + $0x4] sm:$0xf]
      %v1360 = vld [vmem:[%s1357 + $0x8] sm:$0xf]
      %v1361 = vld [vmem:[%s1357 + $0xc] sm:$0xf]
      %v1362 = vld [vmem:[%s1357 + $0x10] sm:$0xf]
      %v1363 = vld [vmem:[%s1357 + $0x14] sm:$0xf]
      %v1364 = vld [vmem:[%s1357 + $0x18] sm:$0xf]
      %v1365 = vld [vmem:[%s1357 + $0x1c] sm:$0xf]
      %s1366 = scalar_lea.vmem %s296, 96
      %v1367 = vld [vmem:[%s1366] sm:$0xf]
      %v1368 = vld [vmem:[%s1366 + $0x4] sm:$0xf]
      %v1369 = vld [vmem:[%s1366 + $0x8] sm:$0xf]
      %v1370 = vld [vmem:[%s1366 + $0xc] sm:$0xf]
      %v1371 = vld [vmem:[%s1366 + $0x10] sm:$0xf]
      %v1372 = vld [vmem:[%s1366 + $0x14] sm:$0xf]
      %v1373 = vld [vmem:[%s1366 + $0x18] sm:$0xf]
      %v1374 = vld [vmem:[%s1366 + $0x1c] sm:$0xf]
      %s1375 = scalar_lea.vmem %s301, 12
      %v1376 = vld [vmem:[%s1375] sm:$0xf]
      %v1385 = vunpack.c.l.b16 %v1367
      %v1386 = vunpack.c.l.b16 %v1368
      %v1387 = vunpack.c.l.b16 %v1369
      %v1388 = vunpack.c.l.b16 %v1370
      %v1389 = vunpack.c.l.b16 %v1371
      %v1390 = vunpack.c.l.b16 %v1372
      %v1391 = vunpack.c.l.b16 %v1373
      %v1392 = vunpack.c.l.b16 %v1374
      %v1393 = vpack.c.b16 %v1386, %v1385
      %v1394 = vpack.c.b16 %v1388, %v1387
      %v1395 = vpack.c.b16 %v1390, %v1389
      %v1396 = vpack.c.b16 %v1392, %v1391
      %v1405 = vunpack.c.l.b16 %v1358
      %v1406 = vunpack.c.l.b16 %v1359
      %v1407 = vunpack.c.l.b16 %v1360
      %v1408 = vunpack.c.l.b16 %v1361
      %v1409 = vunpack.c.l.b16 %v1362
      %v1410 = vunpack.c.l.b16 %v1363
      %v1411 = vunpack.c.l.b16 %v1364
      %v1412 = vunpack.c.l.b16 %v1365
      %v1413 = vpack.c.b16 %v1406, %v1405
      %v1414 = vpack.c.b16 %v1408, %v1407
      %v1415 = vpack.c.b16 %v1410, %v1409
      %v1416 = vpack.c.b16 %v1412, %v1411
      %v1418 = vsel %vm386, %v1393, 0
      %v1421 = vsel %vm386, %v1394, 0
      %v1424 = vsel %vm386, %v1395, 0
      %v1427 = vsel %vm386, %v1396, 0
      %v1430 = vsel %vm386, %v1413, 0
      %v1433 = vsel %vm386, %v1414, 0
      %v1436 = vsel %vm386, %v1415, 0
      %v1439 = vsel %vm386, %v1416, 0
      %1441 = vmatprep.subr.bf16.mxu0 0
      %1442 = vmatpush1.bf16.xpose.msra.mxu0 0
      %1443 = vmatprep.subr.bf16.mxu0 0
      %1444 = vmatpush1.bf16.xpose.msra.mxu0 0
      %1445 = vmatprep.subr.bf16.mxu0 0
      %1446 = vmatpush1.bf16.xpose.msra.mxu0 0
      %1447 = vmatprep.subr.bf16.mxu0 0
      %1448 = vmatpush1.bf16.xpose.msra.mxu0 0
      %1449 = vmatprep.subr.bf16.mxu0 0
      %1450 = vmatpush1.bf16.xpose.msra.mxu0 %v1439
      %1451 = vmatprep.subr.bf16.mxu0 0
      %1452 = vmatpush1.bf16.xpose.msra.mxu0 %v1436
      %1453 = vmatprep.subr.bf16.mxu0 0
      %1454 = vmatpush1.bf16.xpose.msra.mxu0 %v1433
      %1455 = vmatprep.subr.bf16.mxu0 0
      %1456 = vmatpush1.bf16.xpose.msra.mxu0 %v1430
      %1457 = vmatprep.subr.bf16.mxu0 0
      %1458 = vmatpush2.bf16.xpose.msra.mxu0 0
      %1459 = vmatprep.subr.bf16.mxu0 0
      %1460 = vmatpush2.bf16.xpose.msra.mxu0 0
      %1461 = vmatprep.subr.bf16.mxu0 0
      %1462 = vmatpush2.bf16.xpose.msra.mxu0 0
      %1463 = vmatprep.subr.bf16.mxu0 0
      %1464 = vmatpush2.bf16.xpose.msra.mxu0 0
      %1465 = vmatprep.subr.bf16.mxu0 0
      %1466 = vmatpush2.bf16.xpose.msra.mxu0 0
      %1467 = vmatprep.subr.bf16.mxu0 0
      %1468 = vmatpush2.bf16.xpose.msra.mxu0 0
      %1469 = vmatprep.subr.bf16.mxu0 0
      %1470 = vmatpush2.bf16.xpose.msra.mxu0 0
      %1471 = vmatprep.subr.bf16.mxu0 0
      %1472 = vmatpush2.bf16.xpose.msra.mxu0 0
      %1473 = vmatprep.mubr.bf16.mxu0 0
      %1474 = vmatmul.mubr.bf16.gmra.mxu0 %v1418
      %v1475 = vpop.f32.mrf.mxu0
      %v1476 = vadd.f32 0.0, %v1475
      %v1477 = vpop.f32.mrf.mxu0
      %v1478 = vpop.f32.mrf.mxu0
      %v1479 = vadd.f32 0.0, %v1478
      %v1480 = vpop.f32.mrf.mxu0
      %1481 = vmatprep.mubr.bf16.mxu0 0
      %1482 = vmatmul.mubr.bf16.gmra.mxu0 %v1421
      %v1483 = vpop.f32.mrf.mxu0
      %v1484 = vadd.f32 0.0, %v1483
      %v1485 = vpop.f32.mrf.mxu0
      %v1486 = vpop.f32.mrf.mxu0
      %v1487 = vadd.f32 0.0, %v1486
      %v1488 = vpop.f32.mrf.mxu0
      %1489 = vmatprep.mubr.bf16.mxu0 0
      %1490 = vmatmul.mubr.bf16.gmra.mxu0 %v1424
      %v1491 = vpop.f32.mrf.mxu0
      %v1492 = vadd.f32 0.0, %v1491
      %v1493 = vpop.f32.mrf.mxu0
      %v1494 = vpop.f32.mrf.mxu0
      %v1495 = vadd.f32 0.0, %v1494
      %v1496 = vpop.f32.mrf.mxu0
      %1497 = vmatprep.mubr.bf16.mxu0 0
      %1498 = vmatmul.mubr.bf16.gmra.mxu0 %v1427
      %v1499 = vpop.f32.mrf.mxu0
      %v1500 = vadd.f32 0.0, %v1499
      %v1501 = vpop.f32.mrf.mxu0
      %v1502 = vpop.f32.mrf.mxu0
      %v1503 = vadd.f32 0.0, %v1502
      %v1504 = vpop.f32.mrf.mxu0
      %1505 = vdwg.mxu0
      %v1506 = vsel %vm476, %v1476, -inf
      %1507 = vmax.xlane.f32.xlu0 %v1506
      %v1508 = vpop.xlane.xlu0 %1507
      %v1509 = vsel %vm476, %v1479, -inf
      %1510 = vmax.xlane.f32.xlu0 %v1509
      %v1511 = vpop.xlane.xlu0 %1510
      %v1512 = vsel %vm476, %v1484, -inf
      %1513 = vmax.xlane.f32.xlu0 %v1512
      %v1514 = vpop.xlane.xlu0 %1513
      %v1515 = vsel %vm476, %v1487, -inf
      %1516 = vmax.xlane.f32.xlu0 %v1515
      %v1517 = vpop.xlane.xlu0 %1516
      %v1518 = vsel %vm476, %v1492, -inf
      %1519 = vmax.xlane.f32.xlu0 %v1518
      %v1520 = vpop.xlane.xlu0 %1519
      %v1521 = vsel %vm476, %v1495, -inf
      %1522 = vmax.xlane.f32.xlu0 %v1521
      %v1523 = vpop.xlane.xlu0 %1522
      %v1524 = vsel %vm476, %v1500, -inf
      %1525 = vmax.xlane.f32.xlu0 %v1524
      %v1526 = vpop.xlane.xlu0 %1525
      %v1527 = vsel %vm476, %v1503, -inf
      %1528 = vmax.xlane.f32.xlu0 %v1527
      %v1529 = vpop.xlane.xlu0 %1528
      %v1530 = vsub.f32 %v1476, %v1508
      %v1531 = vsub.f32 %v1479, %v1511
      %v1532 = vsub.f32 %v1484, %v1514
      %v1533 = vsub.f32 %v1487, %v1517
      %v1534 = vsub.f32 %v1492, %v1520
      %v1535 = vsub.f32 %v1495, %v1523
      %v1536 = vsub.f32 %v1500, %v1526
      %v1537 = vsub.f32 %v1503, %v1529
      %v1538 = vmul.f32 %v1530, 1.442695
      %v1539 = vpow.pop %v1538
      %v1540 = vmul.f32 %v1531, 1.442695
      %v1541 = vpow.pop %v1540
      %v1542 = vmul.f32 %v1532, 1.442695
      %v1543 = vpow.pop %v1542
      %v1544 = vmul.f32 %v1533, 1.442695
      %v1545 = vpow.pop %v1544
      %v1546 = vmul.f32 %v1534, 1.442695
      %v1547 = vpow.pop %v1546
      %v1548 = vmul.f32 %v1535, 1.442695
      %v1549 = vpow.pop %v1548
      %v1550 = vmul.f32 %v1536, 1.442695
      %v1551 = vpow.pop %v1550
      %v1552 = vmul.f32 %v1537, 1.442695
      %v1553 = vpow.pop %v1552
      %v1554 = vsel %vm476, %v1539, 0.0
      %1555 = vadd.xlane.f32.xlu0 %v1554
      %v1556 = vpop.xlane.xlu0 %1555
      %v1557 = vsel %vm476, %v1541, 0.0
      %1558 = vadd.xlane.f32.xlu0 %v1557
      %v1559 = vpop.xlane.xlu0 %1558
      %v1560 = vsel %vm476, %v1543, 0.0
      %1561 = vadd.xlane.f32.xlu0 %v1560
      %v1562 = vpop.xlane.xlu0 %1561
      %v1563 = vsel %vm476, %v1545, 0.0
      %1564 = vadd.xlane.f32.xlu0 %v1563
      %v1565 = vpop.xlane.xlu0 %1564
      %v1566 = vsel %vm476, %v1547, 0.0
      %1567 = vadd.xlane.f32.xlu0 %v1566
      %v1568 = vpop.xlane.xlu0 %1567
      %v1569 = vsel %vm476, %v1549, 0.0
      %1570 = vadd.xlane.f32.xlu0 %v1569
      %v1571 = vpop.xlane.xlu0 %1570
      %v1572 = vsel %vm476, %v1551, 0.0
      %1573 = vadd.xlane.f32.xlu0 %v1572
      %v1574 = vpop.xlane.xlu0 %1573
      %v1575 = vsel %vm476, %v1553, 0.0
      %1576 = vadd.xlane.f32.xlu0 %v1575
      %v1577 = vpop.xlane.xlu0 %1576
      %v1578 = vrcp.pop %v1556
      %v1579 = vrcp.pop %v1559
      %v1580 = vrcp.pop %v1562
      %v1581 = vrcp.pop %v1565
      %v1582 = vrcp.pop %v1568
      %v1583 = vrcp.pop %v1571
      %v1584 = vrcp.pop %v1574
      %v1585 = vrcp.pop %v1577
      %v1586 = vmul.f32 %v1539, %v1578
      %v1587 = vmul.f32 %v1541, %v1579
      %v1588 = vmul.f32 %v1543, %v1580
      %v1589 = vmul.f32 %v1545, %v1581
      %v1590 = vmul.f32 %v1547, %v1582
      %v1591 = vmul.f32 %v1549, %v1583
      %v1592 = vmul.f32 %v1551, %v1584
      %v1593 = vmul.f32 %v1553, %v1585
      %s1594 = scalar_lea.vmem %s4, 24
      %v1595 = vld [vmem:[%s1594] sm:$0xf]
      %v1596 = vld [vmem:[%s1594 + $0x4] sm:$0xf]
      %v1599 = vunpack.c.l.b16 %v1595
      %v1600 = vunpack.c.l.b16 %v1596
      %v1601 = vpack.c.b16 %v1600, %v1599
      %v1603 = vsel %vm386, %v1601, 0
      %v1606 = vsel %vm575, %v1376, 0
      %1608 = vmatprep.subr.bf16.mxu0 0
      %1609 = vmatpush1.bf16.msra.mxu0 0
      %1610 = vmatprep.subr.bf16.mxu0 0
      %1611 = vmatpush1.bf16.msra.mxu0 0
      %1612 = vmatprep.subr.bf16.mxu0 0
      %1613 = vmatpush1.bf16.msra.mxu0 0
      %1614 = vmatprep.subr.bf16.mxu0 0
      %1615 = vmatpush1.bf16.msra.mxu0 0
      %1616 = vmatprep.subr.bf16.mxu0 0
      %1617 = vmatpush1.bf16.msra.mxu0 0
      %1618 = vmatprep.subr.bf16.mxu0 0
      %1619 = vmatpush1.bf16.msra.mxu0 0
      %1620 = vmatprep.subr.bf16.mxu0 0
      %1621 = vmatpush1.bf16.msra.mxu0 0
      %1622 = vmatprep.subr.bf16.mxu0 0
      %1623 = vmatpush1.bf16.msra.mxu0 %v1606
      %1624 = vmatprep.subr.bf16.mxu0 0
      %1625 = vmatpush2.bf16.msra.mxu0 0
      %1626 = vmatprep.subr.bf16.mxu0 0
      %1627 = vmatpush2.bf16.msra.mxu0 0
      %1628 = vmatprep.subr.bf16.mxu0 0
      %1629 = vmatpush2.bf16.msra.mxu0 0
      %1630 = vmatprep.subr.bf16.mxu0 0
      %1631 = vmatpush2.bf16.msra.mxu0 0
      %1632 = vmatprep.subr.bf16.mxu0 0
      %1633 = vmatpush2.bf16.msra.mxu0 0
      %1634 = vmatprep.subr.bf16.mxu0 0
      %1635 = vmatpush2.bf16.msra.mxu0 0
      %1636 = vmatprep.subr.bf16.mxu0 0
      %1637 = vmatpush2.bf16.msra.mxu0 0
      %1638 = vmatprep.subr.bf16.mxu0 0
      %1639 = vmatpush2.bf16.msra.mxu0 0
      %1640 = vmatprep.mubr.bf16.mxu0 0
      %1641 = vmatmul.mubr.bf16.gmra.mxu0 %v1603
      %v1642 = vpop.f32.mrf.mxu0
      %v1643 = vadd.f32 0.0, %v1642
      %v1644 = vpop.f32.mrf.mxu0
      %v1645 = vpop.f32.mrf.mxu0
      %v1646 = vadd.f32 0.0, %v1645
      %v1647 = vpop.f32.mrf.mxu0
      %1648 = vdwg.mxu0
      %v1649 = vpack.c.bf16 %v1646, %v1643
      %v1650 = vpack.c.bf16 %v1587, %v1586
      %v1651 = vpack.c.bf16 %v1589, %v1588
      %v1652 = vpack.c.bf16 %v1591, %v1590
      %v1653 = vpack.c.bf16 %v1593, %v1592
      %v1655 = vsel %vm476, %v1649, 0
      %1657 = vmatprep.subr.bf16.mxu0 0
      %1658 = vmatpush1.bf16.msra.mxu0 0
      %1659 = vmatprep.subr.bf16.mxu0 0
      %1660 = vmatpush1.bf16.msra.mxu0 0
      %1661 = vmatprep.subr.bf16.mxu0 0
      %1662 = vmatpush1.bf16.msra.mxu0 0
      %1663 = vmatprep.subr.bf16.mxu0 0
      %1664 = vmatpush1.bf16.msra.mxu0 0
      %1665 = vmatprep.subr.bf16.mxu0 0
      %1666 = vmatpush1.bf16.msra.mxu0 %v1653
      %1667 = vmatprep.subr.bf16.mxu0 0
      %1668 = vmatpush1.bf16.msra.mxu0 %v1652
      %1669 = vmatprep.subr.bf16.mxu0 0
      %1670 = vmatpush1.bf16.msra.mxu0 %v1651
      %1671 = vmatprep.subr.bf16.mxu0 0
      %1672 = vmatpush1.bf16.msra.mxu0 %v1650
      %1673 = vmatprep.subr.bf16.mxu0 0
      %1674 = vmatpush2.bf16.msra.mxu0 0
      %1675 = vmatprep.subr.bf16.mxu0 0
      %1676 = vmatpush2.bf16.msra.mxu0 0
      %1677 = vmatprep.subr.bf16.mxu0 0
      %1678 = vmatpush2.bf16.msra.mxu0 0
      %1679 = vmatprep.subr.bf16.mxu0 0
      %1680 = vmatpush2.bf16.msra.mxu0 0
      %1681 = vmatprep.subr.bf16.mxu0 0
      %1682 = vmatpush2.bf16.msra.mxu0 0
      %1683 = vmatprep.subr.bf16.mxu0 0
      %1684 = vmatpush2.bf16.msra.mxu0 0
      %1685 = vmatprep.subr.bf16.mxu0 0
      %1686 = vmatpush2.bf16.msra.mxu0 0
      %1687 = vmatprep.subr.bf16.mxu0 0
      %1688 = vmatpush2.bf16.msra.mxu0 0
      %1689 = vmatprep.mubr.bf16.mxu0 0
      %1690 = vmatmul.mubr.bf16.gmra.mxu0 %v1655
      %v1691 = vpop.f32.mrf.mxu0
      %v1692 = vadd.f32 0.0, %v1691
      %v1693 = vpop.f32.mrf.mxu0
      %v1694 = vpop.f32.mrf.mxu0
      %v1695 = vadd.f32 0.0, %v1694
      %v1696 = vpop.f32.mrf.mxu0
      %1697 = vdwg.mxu0
      %v1698 = vadd.f32 %v1355, %v1692
      %v1699 = vadd.f32 %v1356, %v1695
      %1700 = vst.msk [vmem:[%s311] sm:$0xff] %vm476, %v1698
      %1701 = vst.msk [vmem:[%s311 + $0x8] sm:$0xff] %vm476, %v1699
      %p1702 = scmp.lt.s32.totalorder %s17, 1
      %s1703 = scalar_select %p1702, %s17, 1
      %s1704 = smul.addr %s1703, 2
      %s1705 = smul.addr %s1704, 8
      %s1706 = scalar_lea.vmem %s6, %s1705
      // Predicated region
      $region45: #{atten_block_forward.3} parent=43 // pred_check
        %p1707 = pneg %p181
      $region46: #{atten_block_forward.3} parent=43 // pred_check_branch
        %1709 = sbr.rel (%p1707) target = $region48
      $region47: #{atten_block_forward.3} parent=43 // pred_region
        _
      $region48: #{atten_block_forward.3} parent=43 // pred_fallthru
        _
    $region44: #{atten_block_forward.3} parent=5 // pred_fallthru
      _
    %p1710 = scmp.le.s32.totalorder 2, %s12
    // Predicated region
    $region49: #{atten_block_forward.3} parent=5 // pred_check
      %p1711 = pneg %p1710
    $region50: #{atten_block_forward.3} parent=5 // pred_check_branch
      %1713 = sbr.rel (%p1711) target = $region52
    $region51: #{atten_block_forward.3} parent=5 // pred_region
      %s1714 = ssub.s32 %s12, 2
      // Predicated region
      $region53: #{atten_block_forward.3} parent=51 // pred_check
        %p1715 = pneg %p187
      $region54: #{atten_block_forward.3} parent=51 // pred_check_branch
        %1717 = sbr.rel (%p1715) target = $region56
      $region55: #{atten_block_forward.3} parent=51 // pred_region
        %p1718 = scmp.lt.s32.totalorder %s18, 1
        %s1719 = scalar_select %p1718, %s18, 1
        %s1720 = smul.addr %s1719, 2
        %s1721 = smul.addr %s1720, 8
        %s1722 = scalar_lea.vmem %s6, %s1721
      $region56: #{atten_block_forward.3} parent=51 // pred_fallthru
        _
    $region52: #{atten_block_forward.3} parent=5 // pred_fallthru
      _
  $region6: #{atten_block_forward.3} parent=0 // loop_footer
    %s16 = sadd.s32 1, %s12
  $region7: #{atten_block_forward.3} parent=0 // loop_footer_branch
    %11 = sbr.rel target = $region3
  $region8: #{atten_block_forward.3} parent=0 // loop_exit
    _

</llo_original>
